<compile_context>
chip_gen: v6e
topology: v6e:2x2x1
jax: 0.10.0
libtpu: 0.0.40
codegen_flags: <defaults>
</compile_context>

<pallas_src>
import functools

import jax
import jax.numpy as jnp
from jax import lax
from jax.experimental import pallas as pl
from jax.experimental.pallas import tpu as pltpu


def _full_spec(shape):
    nd = len(shape)
    return pl.BlockSpec(shape, lambda i, _nd=nd: (0,) * _nd)


# --------------------------- batched masked softmax ---------------------------
def _masked_softmax(mask_bias, a_dst, a_src, negative_slope):
    """Masked softmax (unnormalized probs + reciprocal row-sums) for all heads.

    a_dst, a_src : [H, N] per-head attention logits for dst / src nodes
    mask_bias    : [1, N, N] additive mask (0 on edges, -1e30 on non-edges)
    returns p [H, N, N] (unnormalized) and inv [H, N, 1] = 1/rowsum.
    """
    e = a_dst[:, :, None] + a_src[:, None, :]                 # [H, N, N]
    e = jnp.where(e > 0, e, negative_slope * e)               # LeakyReLU(0.2)
    e = e + mask_bias                                         # non-edges -> ~-1e30
    # Row-max subtraction dropped on purpose: unmasked logits are O(1) at these
    # weight scales and exp(-1e30) underflows to exactly 0, so no overflow/NaN.
    p = jnp.exp(e)
    inv = pl.reciprocal(jnp.sum(p, axis=-1, keepdims=True), approx=True)  # EUP
    return p, inv


# ------------------------------ fused forward ---------------------------------
def _gat_fused_kernel(x_ref, adj_ref, blob_ref, o_ref, *,
                      heads, c0, c1, d_out, offs, negative_slope):
    f_in = x_ref.shape[1]
    d0, d1 = heads * c0, heads * c1
    o_w0p, o_b0p, o_a0, o_b0, o_w1, o_a1, o_wd, o_bo = offs

    x = x_ref[...]                                            # [N, F]
    adj = adj_ref[...]                                        # [N, N] adj[dst, src]
    # additive mask, built once, reused by both layers
    mask_bias = jnp.where(adj > 0, 0.0, jnp.float32(-1e30))[None, :, :]

    # ---- static views into the packed parameter blob (single DMA) ------------
    w0p = blob_ref[o_w0p:o_w0p + f_in, 0:d0]        # W_enc @ W0          [F, H*c0]
    b0p = blob_ref[o_b0p:o_b0p + 1, 0:d0]           # b_enc @ W0          [1, H*c0]
    a0 = blob_ref[o_a0:o_a0 + 2 * heads, 0:d0]      # [adst0; asrc0]      [2H, H*c0]
    b0 = blob_ref[o_b0:o_b0 + 1, 0:d0]              # GATConv0 bias       [1, H*c0]
    w1 = blob_ref[o_w1:o_w1 + d0, 0:d1]             # GATConv1 weight     [H*c0, H*c1]
    a1 = blob_ref[o_a1:o_a1 + 2 * heads, 0:d1]      # [adst1; asrc1]      [2H, H*c1]
    wd = blob_ref[o_wd:o_wd + d1, 0:d_out]          # decoder weight      [H*c1, D_out]
    bo = blob_ref[o_bo:o_bo + 1, 0:d_out]           # b1 @ W_dec + b_dec  [1, D_out]

    # ---- encoder + GATConv0 projection (encoder folded on host) --------------
    h0 = jnp.dot(x, w0p, preferred_element_type=jnp.float32) + b0p       # [N, H*c0]

    # ---- layer 0: packed attention logits + batched masked softmax -----------
    att0 = lax.dot_general(a0, h0, (((1,), (1,)), ((), ())),
                           preferred_element_type=jnp.float32)           # [2H, N]
    p0, inv0 = _masked_softmax(mask_bias, att0[:heads], att0[heads:],
                               negative_slope)

    # per-head aggregation; ELU'd head outputs folded straight through the
    # matching row-block of W1 (exact) -> no concatenated h_mid buffer.
    h1 = None
    for hd in range(heads):
        agg = jnp.dot(p0[hd], h0[:, hd * c0:(hd + 1) * c0],
                      preferred_element_type=jnp.float32) * inv0[hd]     # [N, c0]
        agg = agg + b0[:, hd * c0:(hd + 1) * c0]
        # ELU (alpha=1); clamp the dead exp branch so it can never overflow
        agg = jnp.where(agg > 0, agg, jnp.exp(jnp.minimum(agg, 0.0)) - 1.0)
        part = jnp.dot(agg, w1[hd * c0:(hd + 1) * c0, :],
                       preferred_element_type=jnp.float32)               # [N, H*c1]
        h1 = part if h1 is None else h1 + part

    # ---- layer 1: same pattern, fused with the decoder -----------------------
    att1 = lax.dot_general(a1, h1, (((1,), (1,)), ((), ())),
                           preferred_element_type=jnp.float32)           # [2H, N]
    p1, inv1 = _masked_softmax(mask_bias, att1[:heads], att1[heads:],
                               negative_slope)

    out = None
    for hd in range(heads):
        agg = jnp.dot(p1[hd], h1[:, hd * c1:(hd + 1) * c1],
                      preferred_element_type=jnp.float32) * inv1[hd]     # [N, c1]
        part = jnp.dot(agg, wd[hd * c1:(hd + 1) * c1, :],
                       preferred_element_type=jnp.float32)               # [N, D_out]
        out = part if out is None else out + part
    o_ref[...] = out + bo


# ---------------------------------- wrapper -----------------------------------
def _attn_stack(a_dst, a_src, heads, c):
    """Build the block-diagonal [2H, H*C] stack [adst; asrc] so that one
    contraction against h ([N, H*C]) yields both logit sides as [2H, N]."""
    m = jnp.zeros((2 * heads, heads * c), jnp.float32)
    for h in range(heads):
        m = m.at[h, h * c:(h + 1) * c].set(a_dst[h])
        m = m.at[heads + h, h * c:(h + 1) * c].set(a_src[h])
    return m


def _pack_blob(arrs):
    """Pack 2-D f32 arrays into one blob (8-row-aligned entries, lane-padded)."""
    cols = max(a.shape[1] for a in arrs)
    offs, r = [], 0
    for a in arrs:
        offs.append(r)
        r += ((a.shape[0] + 7) // 8) * 8
    rows = ((r + 7) // 8) * 8
    blob = jnp.zeros((rows, cols), jnp.float32)
    for a, o in zip(arrs, offs):
        blob = blob.at[o:o + a.shape[0], :a.shape[1]].set(a.astype(jnp.float32))
    return blob, tuple(offs)


def gat_forward(x, adj, params, *, heads):
    n = x.shape[0]
    c0, c1 = params["c0"], params["c1"]
    d_out = params["w_dec"].shape[1]

    # ---- host-side exact folds (all linear, no activation in between) --------
    w0p = (params["w_enc"] @ params["w0"]).astype(jnp.float32)
    b0p = (params["b_enc"] @ params["w0"]).reshape(1, -1).astype(jnp.float32)
    a0 = _attn_stack(params["adst0"], params["asrc0"], heads, c0)
    b0 = params["b0"].reshape(1, -1).astype(jnp.float32)
    w1 = params["w1"].astype(jnp.float32)
    a1 = _attn_stack(params["adst1"], params["asrc1"], heads, c1)
    wd = params["w_dec"].astype(jnp.float32)
    bo = (params["b1"] @ params["w_dec"] + params["b_dec"]).reshape(1, -1)
    bo = bo.astype(jnp.float32)

    blob, offs = _pack_blob([w0p, b0p, a0, b0, w1, a1, wd, bo])

    kernel = functools.partial(_gat_fused_kernel, heads=heads, c0=c0, c1=c1,
                               d_out=d_out, offs=offs, negative_slope=0.2)
    args = (x, adj, blob)
    return pl.pallas_call(
        kernel,
        out_shape=jax.ShapeDtypeStruct((n, d_out), jnp.float32),
        grid=(1,),
        in_specs=[_full_spec(a.shape) for a in args],
        out_specs=_full_spec((n, d_out)),
        compiler_params=pltpu.CompilerParams(
            dimension_semantics=("arbitrary",)),
    )(*args)


if __name__ == "__main__":
    # hparams: encoder [8 -> 32], decoder [32 -> 8], heads=4,
    #          gat_hidden_channels_per_head=16, gat_layers=2, concat=True
    N, F_IN = 16, 8
    DIM_ENC, DIM_DEC_IN, DIM_OUT = 32, 32, 8
    HEADS, HID_PER_HEAD = 4, 16
    OUT1 = DIM_DEC_IN // HEADS  # last-layer channels per head = 8

    key = jax.random.PRNGKey(0)
    ks = jax.random.split(key, 12)

    # node features
    x = jax.random.normal(ks[0], (N, F_IN), jnp.float32)

    # bidirectional ring graph -> dense adjacency with self loops (GATConv default)
    src = jnp.arange(N)
    dst = (src + 1) % N
    edge_index = jnp.stack([jnp.concatenate([src, dst]),
                            jnp.concatenate([dst, src])])          # [2, 2N]
    adj = jnp.zeros((N, N), jnp.float32)
    adj = adj.at[edge_index[1], edge_index[0]].set(1.0)            # adj[dst, src]
    adj = adj.at[jnp.arange(N), jnp.arange(N)].set(1.0)            # self loops
    # NOTE: rows with no edges and no self loop would give a 0 softmax
    # denominator (inf/NaN), exactly like the PyTorch reference.

    s = 0.1
    params = dict(
        # encoder Linear(F_IN, DIM_ENC)
        w_enc=s * jax.random.normal(ks[1], (F_IN, DIM_ENC), jnp.float32),
        b_enc=s * jax.random.normal(ks[2], (DIM_ENC,), jnp.float32),
        # GATConv(32, 16, heads=4, concat=True)
        w0=s * jax.random.normal(ks[3], (DIM_ENC, HEADS * HID_PER_HEAD), jnp.float32),
        asrc0=s * jax.random.normal(ks[4], (HEADS, HID_PER_HEAD), jnp.float32),
        adst0=s * jax.random.normal(ks[5], (HEADS, HID_PER_HEAD), jnp.float32),
        b0=jnp.zeros((HEADS * HID_PER_HEAD,), jnp.float32),
        c0=HID_PER_HEAD,
        # GATConv(64, 8, heads=4, concat=True) -> 32
        w1=s * jax.random.normal(ks[6], (HEADS * HID_PER_HEAD, HEADS * OUT1), jnp.float32),
        asrc1=s * jax.random.normal(ks[7], (HEADS, OUT1), jnp.float32),
        adst1=s * jax.random.normal(ks[8], (HEADS, OUT1), jnp.float32),
        b1=jnp.zeros((HEADS * OUT1,), jnp.float32),
        c1=OUT1,
        # decoder Linear(32, 8)
        w_dec=s * jax.random.normal(ks[9], (DIM_DEC_IN, DIM_OUT), jnp.float32),
        b_dec=s * jax.random.normal(ks[10], (DIM_OUT,), jnp.float32),
    )

    # TODO(synk): dropout (p=0.1) on features and attention coefficients is a
    # training-only op; this kernel implements eval mode (identity).
    y = gat_forward(x, adj, params, heads=HEADS)
    jax.block_until_ready(y)
    assert y.shape == (N, DIM_OUT)
    print("KERNEL_OK")
</pallas_src>

<mosaic_0001>
module attributes {stable_mosaic.version = 11 : i64} {
  func.func @_gat_fused_kernel(%arg0: i32, %arg1: memref<16x8xf32, #tpu.memory_space<vmem>>, %arg2: memref<16x16xf32, #tpu.memory_space<vmem>>, %arg3: memref<144x64xf32, #tpu.memory_space<vmem>>, %arg4: memref<16x8xf32, #tpu.memory_space<vmem>>) attributes {dimension_semantics = [#tpu.dimension_semantics<arbitrary>], iteration_bounds = array<i64: 1>, scalar_prefetch = 0 : i64, scratch_operands = 0 : i64, tpu.core_type = #tpu.core_type<tc>, window_params = [{pipeline_mode = #tpu.pipeline_mode<synchronous>, transform_indices = @transform_0, window_bounds = array<i64: 16, 8>}, {pipeline_mode = #tpu.pipeline_mode<synchronous>, transform_indices = @transform_1, window_bounds = array<i64: 16, 16>}, {pipeline_mode = #tpu.pipeline_mode<synchronous>, transform_indices = @transform_2, window_bounds = array<i64: 144, 64>}, {pipeline_mode = #tpu.pipeline_mode<synchronous>, transform_indices = @transform_3, window_bounds = array<i64: 16, 8>}]} {
    %c0 = arith.constant 0 : index
    %c0_0 = arith.constant 0 : index
    %0 = vector.load %arg1[%c0, %c0_0] : memref<16x8xf32, #tpu.memory_space<vmem>>, vector<16x8xf32>
    %c0_1 = arith.constant 0 : index
    %c0_2 = arith.constant 0 : index
    %1 = vector.load %arg2[%c0_1, %c0_2] : memref<16x16xf32, #tpu.memory_space<vmem>>, vector<16x16xf32>
    %cst = arith.constant 0.000000e+00 : f32
    %2 = vector.broadcast %cst : f32 to vector<16x16xf32>
    %3 = arith.cmpf ogt, %1, %2 : vector<16x16xf32>
    %cst_3 = arith.constant 0.000000e+00 : f32
    %cst_4 = arith.constant -1.000000e+30 : f32
    %4 = vector.broadcast %cst_3 : f32 to vector<16x16xf32>
    %5 = vector.broadcast %cst_4 : f32 to vector<16x16xf32>
    %6 = arith.select %3, %4, %5 : vector<16x16xi1>, vector<16x16xf32>
    %7 = vector.shape_cast %6 : vector<16x16xf32> to vector<1x16x16xf32>
    %c0_5 = arith.constant 0 : index
    %c0_6 = arith.constant 0 : index
    %8 = vector.load %arg3[%c0_5, %c0_6] : memref<144x64xf32, #tpu.memory_space<vmem>>, vector<8x64xf32>
    %c8 = arith.constant 8 : index
    %c0_7 = arith.constant 0 : index
    %9 = vector.load %arg3[%c8, %c0_7] : memref<144x64xf32, #tpu.memory_space<vmem>>, vector<1x64xf32>
    %c16 = arith.constant 16 : index
    %c0_8 = arith.constant 0 : index
    %10 = vector.load %arg3[%c16, %c0_8] : memref<144x64xf32, #tpu.memory_space<vmem>>, vector<8x64xf32>
    %c24 = arith.constant 24 : index
    %c0_9 = arith.constant 0 : index
    %11 = vector.load %arg3[%c24, %c0_9] : memref<144x64xf32, #tpu.memory_space<vmem>>, vector<1x64xf32>
    %c32 = arith.constant 32 : index
    %c0_10 = arith.constant 0 : index
    %12 = vector.load %arg3[%c32, %c0_10] : memref<144x64xf32, #tpu.memory_space<vmem>>, vector<64x32xf32>
    %c96 = arith.constant 96 : index
    %c0_11 = arith.constant 0 : index
    %13 = vector.load %arg3[%c96, %c0_11] : memref<144x64xf32, #tpu.memory_space<vmem>>, vector<8x32xf32>
    %c104 = arith.constant 104 : index
    %c0_12 = arith.constant 0 : index
    %14 = vector.load %arg3[%c104, %c0_12] : memref<144x64xf32, #tpu.memory_space<vmem>>, vector<32x8xf32>
    %c136 = arith.constant 136 : index
    %c0_13 = arith.constant 0 : index
    %15 = vector.load %arg3[%c136, %c0_13] : memref<144x64xf32, #tpu.memory_space<vmem>>, vector<1x8xf32>
    %cst_14 = arith.constant dense<0.000000e+00> : vector<16x64xf32>
    %16 = tpu.matmul %0, %8, %cst_14 {dimension_numbers = #tpu.dot_dimension_numbers<[1], [0], [0], [1], [0, 0, 1, 1], [], []>} : vector<16x8xf32>, vector<8x64xf32>, vector<16x64xf32> -> vector<16x64xf32>
    %17 = vector.broadcast %9 : vector<1x64xf32> to vector<16x64xf32>
    %18 = arith.addf %16, %17 : vector<16x64xf32>
    %cst_15 = arith.constant dense<0.000000e+00> : vector<8x16xf32>
    %19 = tpu.matmul %10, %18, %cst_15 {dimension_numbers = #tpu.dot_dimension_numbers<[1], [1], [0], [0], [0, 0, 1, 0], [], []>} : vector<8x64xf32>, vector<16x64xf32>, vector<8x16xf32> -> vector<8x16xf32>
    %20 = vector.extract_strided_slice %19 {offsets = [0, 0], sizes = [4, 16], strides = [1, 1]} : vector<8x16xf32> to vector<4x16xf32>
    %21 = vector.extract_strided_slice %19 {offsets = [4, 0], sizes = [4, 16], strides = [1, 1]} : vector<8x16xf32> to vector<4x16xf32>
    %22 = vector.shape_cast %20 : vector<4x16xf32> to vector<4x16x1xf32>
    %23 = vector.shape_cast %21 : vector<4x16xf32> to vector<4x1x16xf32>
    %24 = vector.broadcast %22 : vector<4x16x1xf32> to vector<4x16x16xf32>
    %25 = vector.broadcast %23 : vector<4x1x16xf32> to vector<4x16x16xf32>
    %26 = arith.addf %24, %25 : vector<4x16x16xf32>
    %cst_16 = arith.constant 0.000000e+00 : f32
    %27 = vector.broadcast %cst_16 : f32 to vector<4x16x16xf32>
    %28 = arith.cmpf ogt, %26, %27 : vector<4x16x16xf32>
    %cst_17 = arith.constant 2.000000e-01 : f32
    %29 = vector.broadcast %cst_17 : f32 to vector<4x16x16xf32>
    %30 = arith.mulf %29, %26 : vector<4x16x16xf32>
    %31 = arith.select %28, %26, %30 : vector<4x16x16xi1>, vector<4x16x16xf32>
    %32 = vector.broadcast %7 : vector<1x16x16xf32> to vector<4x16x16xf32>
    %33 = arith.addf %31, %32 : vector<4x16x16xf32>
    %34 = math.exp %33 : vector<4x16x16xf32>
    %cst_18 = arith.constant dense<0.000000e+00> : vector<4x16xf32>
    %35 = vector.multi_reduction <add>, %34, %cst_18 [2] : vector<4x16x16xf32> to vector<4x16xf32>
    %36 = vector.shape_cast %35 : vector<4x16xf32> to vector<4x16x1xf32>
    %37 = tpu.reciprocal %36 {approx = true} : vector<4x16x1xf32> -> vector<4x16x1xf32>
    %38 = vector.extract_strided_slice %34 {offsets = [0, 0, 0], sizes = [1, 16, 16], strides = [1, 1, 1]} : vector<4x16x16xf32> to vector<1x16x16xf32>
    %39 = vector.shape_cast %38 : vector<1x16x16xf32> to vector<16x16xf32>
    %40 = vector.extract_strided_slice %18 {offsets = [0, 0], sizes = [16, 16], strides = [1, 1]} : vector<16x64xf32> to vector<16x16xf32>
    %cst_19 = arith.constant dense<0.000000e+00> : vector<16x16xf32>
    %41 = tpu.matmul %39, %40, %cst_19 {dimension_numbers = #tpu.dot_dimension_numbers<[1], [0], [0], [1], [0, 0, 1, 1], [], []>} : vector<16x16xf32>, vector<16x16xf32>, vector<16x16xf32> -> vector<16x16xf32>
    %42 = vector.extract_strided_slice %37 {offsets = [0, 0, 0], sizes = [1, 16, 1], strides = [1, 1, 1]} : vector<4x16x1xf32> to vector<1x16x1xf32>
    %43 = vector.shape_cast %42 : vector<1x16x1xf32> to vector<16x1xf32>
    %44 = vector.broadcast %43 : vector<16x1xf32> to vector<16x16xf32>
    %45 = arith.mulf %41, %44 : vector<16x16xf32>
    %46 = vector.extract_strided_slice %11 {offsets = [0, 0], sizes = [1, 16], strides = [1, 1]} : vector<1x64xf32> to vector<1x16xf32>
    %47 = vector.broadcast %46 : vector<1x16xf32> to vector<16x16xf32>
    %48 = arith.addf %45, %47 : vector<16x16xf32>
    %cst_20 = arith.constant 0.000000e+00 : f32
    %49 = vector.broadcast %cst_20 : f32 to vector<16x16xf32>
    %50 = arith.cmpf ogt, %48, %49 : vector<16x16xf32>
    %cst_21 = arith.constant 0.000000e+00 : f32
    %51 = vector.broadcast %cst_21 : f32 to vector<16x16xf32>
    %52 = arith.minimumf %48, %51 : vector<16x16xf32>
    %53 = math.exp %52 : vector<16x16xf32>
    %cst_22 = arith.constant 1.000000e+00 : f32
    %54 = vector.broadcast %cst_22 : f32 to vector<16x16xf32>
    %55 = arith.subf %53, %54 : vector<16x16xf32>
    %56 = arith.select %50, %48, %55 : vector<16x16xi1>, vector<16x16xf32>
    %57 = vector.extract_strided_slice %12 {offsets = [0, 0], sizes = [16, 32], strides = [1, 1]} : vector<64x32xf32> to vector<16x32xf32>
    %cst_23 = arith.constant dense<0.000000e+00> : vector<16x32xf32>
    %58 = tpu.matmul %56, %57, %cst_23 {dimension_numbers = #tpu.dot_dimension_numbers<[1], [0], [0], [1], [0, 0, 1, 1], [], []>} : vector<16x16xf32>, vector<16x32xf32>, vector<16x32xf32> -> vector<16x32xf32>
    %59 = vector.extract_strided_slice %34 {offsets = [1, 0, 0], sizes = [1, 16, 16], strides = [1, 1, 1]} : vector<4x16x16xf32> to vector<1x16x16xf32>
    %60 = vector.shape_cast %59 : vector<1x16x16xf32> to vector<16x16xf32>
    %61 = vector.extract_strided_slice %18 {offsets = [0, 16], sizes = [16, 16], strides = [1, 1]} : vector<16x64xf32> to vector<16x16xf32>
    %cst_24 = arith.constant dense<0.000000e+00> : vector<16x16xf32>
    %62 = tpu.matmul %60, %61, %cst_24 {dimension_numbers = #tpu.dot_dimension_numbers<[1], [0], [0], [1], [0, 0, 1, 1], [], []>} : vector<16x16xf32>, vector<16x16xf32>, vector<16x16xf32> -> vector<16x16xf32>
    %63 = vector.extract_strided_slice %37 {offsets = [1, 0, 0], sizes = [1, 16, 1], strides = [1, 1, 1]} : vector<4x16x1xf32> to vector<1x16x1xf32>
    %64 = vector.shape_cast %63 : vector<1x16x1xf32> to vector<16x1xf32>
    %65 = vector.broadcast %64 : vector<16x1xf32> to vector<16x16xf32>
    %66 = arith.mulf %62, %65 : vector<16x16xf32>
    %67 = vector.extract_strided_slice %11 {offsets = [0, 16], sizes = [1, 16], strides = [1, 1]} : vector<1x64xf32> to vector<1x16xf32>
    %68 = vector.broadcast %67 : vector<1x16xf32> to vector<16x16xf32>
    %69 = arith.addf %66, %68 : vector<16x16xf32>
    %cst_25 = arith.constant 0.000000e+00 : f32
    %70 = vector.broadcast %cst_25 : f32 to vector<16x16xf32>
    %71 = arith.cmpf ogt, %69, %70 : vector<16x16xf32>
    %cst_26 = arith.constant 0.000000e+00 : f32
    %72 = vector.broadcast %cst_26 : f32 to vector<16x16xf32>
    %73 = arith.minimumf %69, %72 : vector<16x16xf32>
    %74 = math.exp %73 : vector<16x16xf32>
    %cst_27 = arith.constant 1.000000e+00 : f32
    %75 = vector.broadcast %cst_27 : f32 to vector<16x16xf32>
    %76 = arith.subf %74, %75 : vector<16x16xf32>
    %77 = arith.select %71, %69, %76 : vector<16x16xi1>, vector<16x16xf32>
    %78 = vector.extract_strided_slice %12 {offsets = [16, 0], sizes = [16, 32], strides = [1, 1]} : vector<64x32xf32> to vector<16x32xf32>
    %cst_28 = arith.constant dense<0.000000e+00> : vector<16x32xf32>
    %79 = tpu.matmul %77, %78, %cst_28 {dimension_numbers = #tpu.dot_dimension_numbers<[1], [0], [0], [1], [0, 0, 1, 1], [], []>} : vector<16x16xf32>, vector<16x32xf32>, vector<16x32xf32> -> vector<16x32xf32>
    %80 = arith.addf %58, %79 : vector<16x32xf32>
    %81 = vector.extract_strided_slice %34 {offsets = [2, 0, 0], sizes = [1, 16, 16], strides = [1, 1, 1]} : vector<4x16x16xf32> to vector<1x16x16xf32>
    %82 = vector.shape_cast %81 : vector<1x16x16xf32> to vector<16x16xf32>
    %83 = vector.extract_strided_slice %18 {offsets = [0, 32], sizes = [16, 16], strides = [1, 1]} : vector<16x64xf32> to vector<16x16xf32>
    %cst_29 = arith.constant dense<0.000000e+00> : vector<16x16xf32>
    %84 = tpu.matmul %82, %83, %cst_29 {dimension_numbers = #tpu.dot_dimension_numbers<[1], [0], [0], [1], [0, 0, 1, 1], [], []>} : vector<16x16xf32>, vector<16x16xf32>, vector<16x16xf32> -> vector<16x16xf32>
    %85 = vector.extract_strided_slice %37 {offsets = [2, 0, 0], sizes = [1, 16, 1], strides = [1, 1, 1]} : vector<4x16x1xf32> to vector<1x16x1xf32>
    %86 = vector.shape_cast %85 : vector<1x16x1xf32> to vector<16x1xf32>
    %87 = vector.broadcast %86 : vector<16x1xf32> to vector<16x16xf32>
    %88 = arith.mulf %84, %87 : vector<16x16xf32>
    %89 = vector.extract_strided_slice %11 {offsets = [0, 32], sizes = [1, 16], strides = [1, 1]} : vector<1x64xf32> to vector<1x16xf32>
    %90 = vector.broadcast %89 : vector<1x16xf32> to vector<16x16xf32>
    %91 = arith.addf %88, %90 : vector<16x16xf32>
    %cst_30 = arith.constant 0.000000e+00 : f32
    %92 = vector.broadcast %cst_30 : f32 to vector<16x16xf32>
    %93 = arith.cmpf ogt, %91, %92 : vector<16x16xf32>
    %cst_31 = arith.constant 0.000000e+00 : f32
    %94 = vector.broadcast %cst_31 : f32 to vector<16x16xf32>
    %95 = arith.minimumf %91, %94 : vector<16x16xf32>
    %96 = math.exp %95 : vector<16x16xf32>
    %cst_32 = arith.constant 1.000000e+00 : f32
    %97 = vector.broadcast %cst_32 : f32 to vector<16x16xf32>
    %98 = arith.subf %96, %97 : vector<16x16xf32>
    %99 = arith.select %93, %91, %98 : vector<16x16xi1>, vector<16x16xf32>
    %100 = vector.extract_strided_slice %12 {offsets = [32, 0], sizes = [16, 32], strides = [1, 1]} : vector<64x32xf32> to vector<16x32xf32>
    %cst_33 = arith.constant dense<0.000000e+00> : vector<16x32xf32>
    %101 = tpu.matmul %99, %100, %cst_33 {dimension_numbers = #tpu.dot_dimension_numbers<[1], [0], [0], [1], [0, 0, 1, 1], [], []>} : vector<16x16xf32>, vector<16x32xf32>, vector<16x32xf32> -> vector<16x32xf32>
    %102 = arith.addf %80, %101 : vector<16x32xf32>
    %103 = vector.extract_strided_slice %34 {offsets = [3, 0, 0], sizes = [1, 16, 16], strides = [1, 1, 1]} : vector<4x16x16xf32> to vector<1x16x16xf32>
    %104 = vector.shape_cast %103 : vector<1x16x16xf32> to vector<16x16xf32>
    %105 = vector.extract_strided_slice %18 {offsets = [0, 48], sizes = [16, 16], strides = [1, 1]} : vector<16x64xf32> to vector<16x16xf32>
    %cst_34 = arith.constant dense<0.000000e+00> : vector<16x16xf32>
    %106 = tpu.matmul %104, %105, %cst_34 {dimension_numbers = #tpu.dot_dimension_numbers<[1], [0], [0], [1], [0, 0, 1, 1], [], []>} : vector<16x16xf32>, vector<16x16xf32>, vector<16x16xf32> -> vector<16x16xf32>
    %107 = vector.extract_strided_slice %37 {offsets = [3, 0, 0], sizes = [1, 16, 1], strides = [1, 1, 1]} : vector<4x16x1xf32> to vector<1x16x1xf32>
    %108 = vector.shape_cast %107 : vector<1x16x1xf32> to vector<16x1xf32>
    %109 = vector.broadcast %108 : vector<16x1xf32> to vector<16x16xf32>
    %110 = arith.mulf %106, %109 : vector<16x16xf32>
    %111 = vector.extract_strided_slice %11 {offsets = [0, 48], sizes = [1, 16], strides = [1, 1]} : vector<1x64xf32> to vector<1x16xf32>
    %112 = vector.broadcast %111 : vector<1x16xf32> to vector<16x16xf32>
    %113 = arith.addf %110, %112 : vector<16x16xf32>
    %cst_35 = arith.constant 0.000000e+00 : f32
    %114 = vector.broadcast %cst_35 : f32 to vector<16x16xf32>
    %115 = arith.cmpf ogt, %113, %114 : vector<16x16xf32>
    %cst_36 = arith.constant 0.000000e+00 : f32
    %116 = vector.broadcast %cst_36 : f32 to vector<16x16xf32>
    %117 = arith.minimumf %113, %116 : vector<16x16xf32>
    %118 = math.exp %117 : vector<16x16xf32>
    %cst_37 = arith.constant 1.000000e+00 : f32
    %119 = vector.broadcast %cst_37 : f32 to vector<16x16xf32>
    %120 = arith.subf %118, %119 : vector<16x16xf32>
    %121 = arith.select %115, %113, %120 : vector<16x16xi1>, vector<16x16xf32>
    %122 = vector.extract_strided_slice %12 {offsets = [48, 0], sizes = [16, 32], strides = [1, 1]} : vector<64x32xf32> to vector<16x32xf32>
    %cst_38 = arith.constant dense<0.000000e+00> : vector<16x32xf32>
    %123 = tpu.matmul %121, %122, %cst_38 {dimension_numbers = #tpu.dot_dimension_numbers<[1], [0], [0], [1], [0, 0, 1, 1], [], []>} : vector<16x16xf32>, vector<16x32xf32>, vector<16x32xf32> -> vector<16x32xf32>
    %124 = arith.addf %102, %123 : vector<16x32xf32>
    %cst_39 = arith.constant dense<0.000000e+00> : vector<8x16xf32>
    %125 = tpu.matmul %13, %124, %cst_39 {dimension_numbers = #tpu.dot_dimension_numbers<[1], [1], [0], [0], [0, 0, 1, 0], [], []>} : vector<8x32xf32>, vector<16x32xf32>, vector<8x16xf32> -> vector<8x16xf32>
    %126 = vector.extract_strided_slice %125 {offsets = [0, 0], sizes = [4, 16], strides = [1, 1]} : vector<8x16xf32> to vector<4x16xf32>
    %127 = vector.extract_strided_slice %125 {offsets = [4, 0], sizes = [4, 16], strides = [1, 1]} : vector<8x16xf32> to vector<4x16xf32>
    %128 = vector.shape_cast %126 : vector<4x16xf32> to vector<4x16x1xf32>
    %129 = vector.shape_cast %127 : vector<4x16xf32> to vector<4x1x16xf32>
    %130 = vector.broadcast %128 : vector<4x16x1xf32> to vector<4x16x16xf32>
    %131 = vector.broadcast %129 : vector<4x1x16xf32> to vector<4x16x16xf32>
    %132 = arith.addf %130, %131 : vector<4x16x16xf32>
    %cst_40 = arith.constant 0.000000e+00 : f32
    %133 = vector.broadcast %cst_40 : f32 to vector<4x16x16xf32>
    %134 = arith.cmpf ogt, %132, %133 : vector<4x16x16xf32>
    %cst_41 = arith.constant 2.000000e-01 : f32
    %135 = vector.broadcast %cst_41 : f32 to vector<4x16x16xf32>
    %136 = arith.mulf %135, %132 : vector<4x16x16xf32>
    %137 = arith.select %134, %132, %136 : vector<4x16x16xi1>, vector<4x16x16xf32>
    %138 = vector.broadcast %7 : vector<1x16x16xf32> to vector<4x16x16xf32>
    %139 = arith.addf %137, %138 : vector<4x16x16xf32>
    %140 = math.exp %139 : vector<4x16x16xf32>
    %cst_42 = arith.constant dense<0.000000e+00> : vector<4x16xf32>
    %141 = vector.multi_reduction <add>, %140, %cst_42 [2] : vector<4x16x16xf32> to vector<4x16xf32>
    %142 = vector.shape_cast %141 : vector<4x16xf32> to vector<4x16x1xf32>
    %143 = tpu.reciprocal %142 {approx = true} : vector<4x16x1xf32> -> vector<4x16x1xf32>
    %144 = vector.extract_strided_slice %140 {offsets = [0, 0, 0], sizes = [1, 16, 16], strides = [1, 1, 1]} : vector<4x16x16xf32> to vector<1x16x16xf32>
    %145 = vector.shape_cast %144 : vector<1x16x16xf32> to vector<16x16xf32>
    %146 = vector.extract_strided_slice %124 {offsets = [0, 0], sizes = [16, 8], strides = [1, 1]} : vector<16x32xf32> to vector<16x8xf32>
    %cst_43 = arith.constant dense<0.000000e+00> : vector<16x8xf32>
    %147 = tpu.matmul %145, %146, %cst_43 {dimension_numbers = #tpu.dot_dimension_numbers<[1], [0], [0], [1], [0, 0, 1, 1], [], []>} : vector<16x16xf32>, vector<16x8xf32>, vector<16x8xf32> -> vector<16x8xf32>
    %148 = vector.extract_strided_slice %143 {offsets = [0, 0, 0], sizes = [1, 16, 1], strides = [1, 1, 1]} : vector<4x16x1xf32> to vector<1x16x1xf32>
    %149 = vector.shape_cast %148 : vector<1x16x1xf32> to vector<16x1xf32>
    %150 = vector.broadcast %149 : vector<16x1xf32> to vector<16x8xf32>
    %151 = arith.mulf %147, %150 : vector<16x8xf32>
    %152 = vector.extract_strided_slice %14 {offsets = [0, 0], sizes = [8, 8], strides = [1, 1]} : vector<32x8xf32> to vector<8x8xf32>
    %cst_44 = arith.constant dense<0.000000e+00> : vector<16x8xf32>
    %153 = tpu.matmul %151, %152, %cst_44 {dimension_numbers = #tpu.dot_dimension_numbers<[1], [0], [0], [1], [0, 0, 1, 1], [], []>} : vector<16x8xf32>, vector<8x8xf32>, vector<16x8xf32> -> vector<16x8xf32>
    %154 = vector.extract_strided_slice %140 {offsets = [1, 0, 0], sizes = [1, 16, 16], strides = [1, 1, 1]} : vector<4x16x16xf32> to vector<1x16x16xf32>
    %155 = vector.shape_cast %154 : vector<1x16x16xf32> to vector<16x16xf32>
    %156 = vector.extract_strided_slice %124 {offsets = [0, 8], sizes = [16, 8], strides = [1, 1]} : vector<16x32xf32> to vector<16x8xf32>
    %cst_45 = arith.constant dense<0.000000e+00> : vector<16x8xf32>
    %157 = tpu.matmul %155, %156, %cst_45 {dimension_numbers = #tpu.dot_dimension_numbers<[1], [0], [0], [1], [0, 0, 1, 1], [], []>} : vector<16x16xf32>, vector<16x8xf32>, vector<16x8xf32> -> vector<16x8xf32>
    %158 = vector.extract_strided_slice %143 {offsets = [1, 0, 0], sizes = [1, 16, 1], strides = [1, 1, 1]} : vector<4x16x1xf32> to vector<1x16x1xf32>
    %159 = vector.shape_cast %158 : vector<1x16x1xf32> to vector<16x1xf32>
    %160 = vector.broadcast %159 : vector<16x1xf32> to vector<16x8xf32>
    %161 = arith.mulf %157, %160 : vector<16x8xf32>
    %162 = vector.extract_strided_slice %14 {offsets = [8, 0], sizes = [8, 8], strides = [1, 1]} : vector<32x8xf32> to vector<8x8xf32>
    %cst_46 = arith.constant dense<0.000000e+00> : vector<16x8xf32>
    %163 = tpu.matmul %161, %162, %cst_46 {dimension_numbers = #tpu.dot_dimension_numbers<[1], [0], [0], [1], [0, 0, 1, 1], [], []>} : vector<16x8xf32>, vector<8x8xf32>, vector<16x8xf32> -> vector<16x8xf32>
    %164 = arith.addf %153, %163 : vector<16x8xf32>
    %165 = vector.extract_strided_slice %140 {offsets = [2, 0, 0], sizes = [1, 16, 16], strides = [1, 1, 1]} : vector<4x16x16xf32> to vector<1x16x16xf32>
    %166 = vector.shape_cast %165 : vector<1x16x16xf32> to vector<16x16xf32>
    %167 = vector.extract_strided_slice %124 {offsets = [0, 16], sizes = [16, 8], strides = [1, 1]} : vector<16x32xf32> to vector<16x8xf32>
    %cst_47 = arith.constant dense<0.000000e+00> : vector<16x8xf32>
    %168 = tpu.matmul %166, %167, %cst_47 {dimension_numbers = #tpu.dot_dimension_numbers<[1], [0], [0], [1], [0, 0, 1, 1], [], []>} : vector<16x16xf32>, vector<16x8xf32>, vector<16x8xf32> -> vector<16x8xf32>
    %169 = vector.extract_strided_slice %143 {offsets = [2, 0, 0], sizes = [1, 16, 1], strides = [1, 1, 1]} : vector<4x16x1xf32> to vector<1x16x1xf32>
    %170 = vector.shape_cast %169 : vector<1x16x1xf32> to vector<16x1xf32>
    %171 = vector.broadcast %170 : vector<16x1xf32> to vector<16x8xf32>
    %172 = arith.mulf %168, %171 : vector<16x8xf32>
    %173 = vector.extract_strided_slice %14 {offsets = [16, 0], sizes = [8, 8], strides = [1, 1]} : vector<32x8xf32> to vector<8x8xf32>
    %cst_48 = arith.constant dense<0.000000e+00> : vector<16x8xf32>
    %174 = tpu.matmul %172, %173, %cst_48 {dimension_numbers = #tpu.dot_dimension_numbers<[1], [0], [0], [1], [0, 0, 1, 1], [], []>} : vector<16x8xf32>, vector<8x8xf32>, vector<16x8xf32> -> vector<16x8xf32>
    %175 = arith.addf %164, %174 : vector<16x8xf32>
    %176 = vector.extract_strided_slice %140 {offsets = [3, 0, 0], sizes = [1, 16, 16], strides = [1, 1, 1]} : vector<4x16x16xf32> to vector<1x16x16xf32>
    %177 = vector.shape_cast %176 : vector<1x16x16xf32> to vector<16x16xf32>
    %178 = vector.extract_strided_slice %124 {offsets = [0, 24], sizes = [16, 8], strides = [1, 1]} : vector<16x32xf32> to vector<16x8xf32>
    %cst_49 = arith.constant dense<0.000000e+00> : vector<16x8xf32>
    %179 = tpu.matmul %177, %178, %cst_49 {dimension_numbers = #tpu.dot_dimension_numbers<[1], [0], [0], [1], [0, 0, 1, 1], [], []>} : vector<16x16xf32>, vector<16x8xf32>, vector<16x8xf32> -> vector<16x8xf32>
    %180 = vector.extract_strided_slice %143 {offsets = [3, 0, 0], sizes = [1, 16, 1], strides = [1, 1, 1]} : vector<4x16x1xf32> to vector<1x16x1xf32>
    %181 = vector.shape_cast %180 : vector<1x16x1xf32> to vector<16x1xf32>
    %182 = vector.broadcast %181 : vector<16x1xf32> to vector<16x8xf32>
    %183 = arith.mulf %179, %182 : vector<16x8xf32>
    %184 = vector.extract_strided_slice %14 {offsets = [24, 0], sizes = [8, 8], strides = [1, 1]} : vector<32x8xf32> to vector<8x8xf32>
    %cst_50 = arith.constant dense<0.000000e+00> : vector<16x8xf32>
    %185 = tpu.matmul %183, %184, %cst_50 {dimension_numbers = #tpu.dot_dimension_numbers<[1], [0], [0], [1], [0, 0, 1, 1], [], []>} : vector<16x8xf32>, vector<8x8xf32>, vector<16x8xf32> -> vector<16x8xf32>
    %186 = arith.addf %175, %185 : vector<16x8xf32>
    %187 = vector.broadcast %15 : vector<1x8xf32> to vector<16x8xf32>
    %188 = arith.addf %186, %187 : vector<16x8xf32>
    %c0_51 = arith.constant 0 : index
    %c0_52 = arith.constant 0 : index
    %189 = vector.load %arg4[%c0_51, %c0_52] : memref<16x8xf32, #tpu.memory_space<vmem>>, vector<16x8xf32>
    tpu.vector_store %arg4[%c0_51, %c0_52], %188 {strides = array<i32>} : memref<16x8xf32, #tpu.memory_space<vmem>>, vector<16x8xf32>,
    return
  }
  func.func @transform_0(%arg0: i32) -> (i32, i32) {
    %c0_i32 = arith.constant 0 : i32
    %c0_i32_0 = arith.constant 0 : i32
    %c0_i32_1 = arith.constant 0 : i32
    return %c0_i32, %c0_i32_0 : i32, i32
  }
  func.func @transform_1(%arg0: i32) -> (i32, i32) {
    %c0_i32 = arith.constant 0 : i32
    %c0_i32_0 = arith.constant 0 : i32
    %c0_i32_1 = arith.constant 0 : i32
    return %c0_i32, %c0_i32_0 : i32, i32
  }
  func.func @transform_2(%arg0: i32) -> (i32, i32) {
    %c0_i32 = arith.constant 0 : i32
    %c0_i32_0 = arith.constant 0 : i32
    %c0_i32_1 = arith.constant 0 : i32
    return %c0_i32, %c0_i32_0 : i32, i32
  }
  func.func @transform_3(%arg0: i32) -> (i32, i32) {
    %c0_i32 = arith.constant 0 : i32
    %c0_i32_0 = arith.constant 0 : i32
    %c0_i32_1 = arith.constant 0 : i32
    return %c0_i32, %c0_i32_0 : i32, i32
  }
}

</mosaic_0001>

<llo_original>
// kernel: tpu_custom_call.1
$region0: #{tpu_custom_call.1}
  #allocation0 [shape = 'u32[]', space=smem, size = 0x4, offset = 0x4, fixed_abs, tag = 'smem constant byte address 0x4 - core index']
  #allocation1 [shape = 'u32[144,128]{1,0:T(1,128)}', space=vmem, size = 0x12000, scoped, tag = 'internal scratch']
  %s0 = inlined_call_operand.vmem [shape: f32[16,8], index: 0, kind: input, shape index: {}]
  %s1 = inlined_call_operand.vmem [shape: f32[16,16], index: 1, kind: input, shape index: {}]
  %s2 = inlined_call_operand.vmem [shape: f32[144,64], index: 2, kind: input, shape index: {}]
  %s3 = inlined_call_operand.vmem [shape: f32[16,8], index: 3, kind: output, shape index: {}]
  %s4 = sld [smem:[#allocation0]]
  $region22: #{tpu_custom_call.1} parent=0
    _
  %s6 = ssub.s32 1, %s4
  %s7 = scalar_select 0, %s6, %s4
  // Predicated region
  $region2: #{tpu_custom_call.1} parent=0 // pred_check
    _
  $region3: #{tpu_custom_call.1} parent=0 // pred_check_branch
    %9 = sbr.rel (0) target = $region5
  $region4: #{tpu_custom_call.1} parent=0 // pred_region
    _
  $region5: #{tpu_custom_call.1} parent=0 // pred_fallthru
    _
  // Predicated region
  $region6: #{tpu_custom_call.1} parent=0 // pred_check
    _
  $region7: #{tpu_custom_call.1} parent=0 // pred_check_branch
    %11 = sbr.rel (0) target = $region9
  $region8: #{tpu_custom_call.1} parent=0 // pred_region
    _
  $region9: #{tpu_custom_call.1} parent=0 // pred_fallthru
    _
  // Predicated region
  $region10: #{tpu_custom_call.1} parent=0 // pred_check
    _
  $region11: #{tpu_custom_call.1} parent=0 // pred_check_branch
    %13 = sbr.rel (0) target = $region13
  $region12: #{tpu_custom_call.1} parent=0 // pred_region
    _
  $region13: #{tpu_custom_call.1} parent=0 // pred_fallthru
    _
  %v14 = vld [vmem:[%s0] sm:$0xff]
  %v15 = vld [vmem:[%s0 + $0x8] sm:$0xff]
  %v16 = vld [vmem:[%s1] sm:$0xff]
  %v17 = vld [vmem:[%s1 + $0x8] sm:$0xff]
  %vm18 = vcmp.gt.f32.partialorder %v16, 0.0
  %vm19 = vcmp.gt.f32.partialorder %v17, 0.0
  %v20 = vsel %vm18, 0.0, -1e+30
  %v21 = vsel %vm19, 0.0, -1e+30
  %v22 = vld [vmem:[%s2] sm:$0xff]
  %v23 = vld [vmem:[%s2 + $0x8] sm:$0x1]
  %v24 = vld [vmem:[%s2 + $0x10] sm:$0xff]
  %v25 = vld [vmem:[%s2 + $0x18] sm:$0x1]
  %v26 = vld [vmem:[%s2 + $0x20] sm:$0xff]
  %v27 = vld [vmem:[%s2 + $0x28] sm:$0xff]
  %v28 = vld [vmem:[%s2 + $0x30] sm:$0xff]
  %v29 = vld [vmem:[%s2 + $0x38] sm:$0xff]
  %v30 = vld [vmem:[%s2 + $0x40] sm:$0xff]
  %v31 = vld [vmem:[%s2 + $0x48] sm:$0xff]
  %v32 = vld [vmem:[%s2 + $0x50] sm:$0xff]
  %v33 = vld [vmem:[%s2 + $0x58] sm:$0xff]
  %v34 = vld [vmem:[%s2 + $0x60] sm:$0xff]
  %v35 = vld [vmem:[%s2 + $0x68] sm:$0xff]
  %v36 = vld [vmem:[%s2 + $0x70] sm:$0xff]
  %v37 = vld [vmem:[%s2 + $0x78] sm:$0xff]
  %v38 = vld [vmem:[%s2 + $0x80] sm:$0xff]
  %v39 = vld [vmem:[%s2 + $0x88] sm:$0x1]
  %v40 = vlaneseq
  %v41 = vshrl.u32 %v40, 7
  %v42 = vsub.s32 0, %v41
  %v43 = vrot.slane %v23, %v42
  %vm44 = vcmask 64512
  %v46 = vsel %vm44, %v14, 0
  %v49 = vsel %vm44, %v15, 0
  %51 = vmatprep.subr.mxu0 0.0
  %52 = vmatpush1.msra.mxu0 0.0
  %53 = vmatprep.subr.mxu0 0.0
  %54 = vmatpush1.msra.mxu0 0.0
  %55 = vmatprep.subr.mxu0 0.0
  %56 = vmatpush1.msra.mxu0 0.0
  %57 = vmatprep.subr.mxu0 0.0
  %58 = vmatpush1.msra.mxu0 0.0
  %59 = vmatprep.subr.mxu0 0.0
  %60 = vmatpush1.msra.mxu0 0.0
  %61 = vmatprep.subr.mxu0 0.0
  %62 = vmatpush1.msra.mxu0 0.0
  %63 = vmatprep.subr.mxu0 0.0
  %64 = vmatpush1.msra.mxu0 0.0
  %65 = vmatprep.subr.mxu0 0.0
  %66 = vmatpush1.msra.mxu0 0.0
  %67 = vmatprep.subr.mxu0 0.0
  %68 = vmatpush1.msra.mxu0 0.0
  %69 = vmatprep.subr.mxu0 0.0
  %70 = vmatpush1.msra.mxu0 0.0
  %71 = vmatprep.subr.mxu0 0.0
  %72 = vmatpush1.msra.mxu0 0.0
  %73 = vmatprep.subr.mxu0 0.0
  %74 = vmatpush1.msra.mxu0 0.0
  %75 = vmatprep.subr.mxu0 0.0
  %76 = vmatpush1.msra.mxu0 0.0
  %77 = vmatprep.subr.mxu0 0.0
  %78 = vmatpush1.msra.mxu0 0.0
  %79 = vmatprep.subr.mxu0 0.0
  %80 = vmatpush1.msra.mxu0 0.0
  %81 = vmatprep.subr.mxu0 0.0
  %82 = vmatpush1.msra.mxu0 %v22
  %83 = vmatprep.subr.mxu0 0.0
  %84 = vmatpush2.msra.mxu0 0.0
  %85 = vmatprep.subr.mxu0 0.0
  %86 = vmatpush2.msra.mxu0 0.0
  %87 = vmatprep.subr.mxu0 0.0
  %88 = vmatpush2.msra.mxu0 0.0
  %89 = vmatprep.subr.mxu0 0.0
  %90 = vmatpush2.msra.mxu0 0.0
  %91 = vmatprep.subr.mxu0 0.0
  %92 = vmatpush2.msra.mxu0 0.0
  %93 = vmatprep.subr.mxu0 0.0
  %94 = vmatpush2.msra.mxu0 0.0
  %95 = vmatprep.subr.mxu0 0.0
  %96 = vmatpush2.msra.mxu0 0.0
  %97 = vmatprep.subr.mxu0 0.0
  %98 = vmatpush2.msra.mxu0 0.0
  %99 = vmatprep.subr.mxu0 0.0
  %100 = vmatpush2.msra.mxu0 0.0
  %101 = vmatprep.subr.mxu0 0.0
  %102 = vmatpush2.msra.mxu0 0.0
  %103 = vmatprep.subr.mxu0 0.0
  %104 = vmatpush2.msra.mxu0 0.0
  %105 = vmatprep.subr.mxu0 0.0
  %106 = vmatpush2.msra.mxu0 0.0
  %107 = vmatprep.subr.mxu0 0.0
  %108 = vmatpush2.msra.mxu0 0.0
  %109 = vmatprep.subr.mxu0 0.0
  %110 = vmatpush2.msra.mxu0 0.0
  %111 = vmatprep.subr.mxu0 0.0
  %112 = vmatpush2.msra.mxu0 0.0
  %113 = vmatprep.subr.mxu0 0.0
  %114 = vmatpush2.msra.mxu0 0.0
  %115 = vmatprep.mubr.f32.mxu0 0.0
  %116 = vmatmul.mubr.f32.gmra.mxu0 %v46
  %v117 = vpop.f32.mrf.mxu0
  %v118 = vadd.f32 %v43, %v117
  %v119 = vpop.f32.mrf.mxu0
  %120 = vmatprep.mubr.f32.mxu0 0.0
  %121 = vmatmul.mubr.f32.gmra.mxu0 %v49
  %v122 = vpop.f32.mrf.mxu0
  %v123 = vadd.f32 %v43, %v122
  %v124 = vpop.f32.mrf.mxu0
  %125 = vdwg.mxu0
  %vm126 = vcmask 523264
  %v128 = vsel %vm126, %v24, 0
  %v131 = vsel %vm126, %v118, 0
  %v134 = vsel %vm126, %v123, 0
  %136 = vmatprep.subr.mxu0 0.0
  %137 = vmatpush1.xpose.msra.mxu0 0.0
  %138 = vmatprep.subr.mxu0 0.0
  %139 = vmatpush1.xpose.msra.mxu0 0.0
  %140 = vmatprep.subr.mxu0 0.0
  %141 = vmatpush1.xpose.msra.mxu0 0.0
  %142 = vmatprep.subr.mxu0 0.0
  %143 = vmatpush1.xpose.msra.mxu0 0.0
  %144 = vmatprep.subr.mxu0 0.0
  %145 = vmatpush1.xpose.msra.mxu0 0.0
  %146 = vmatprep.subr.mxu0 0.0
  %147 = vmatpush1.xpose.msra.mxu0 0.0
  %148 = vmatprep.subr.mxu0 0.0
  %149 = vmatpush1.xpose.msra.mxu0 0.0
  %150 = vmatprep.subr.mxu0 0.0
  %151 = vmatpush1.xpose.msra.mxu0 0.0
  %152 = vmatprep.subr.mxu0 0.0
  %153 = vmatpush1.xpose.msra.mxu0 0.0
  %154 = vmatprep.subr.mxu0 0.0
  %155 = vmatpush1.xpose.msra.mxu0 0.0
  %156 = vmatprep.subr.mxu0 0.0
  %157 = vmatpush1.xpose.msra.mxu0 0.0
  %158 = vmatprep.subr.mxu0 0.0
  %159 = vmatpush1.xpose.msra.mxu0 0.0
  %160 = vmatprep.subr.mxu0 0.0
  %161 = vmatpush1.xpose.msra.mxu0 0.0
  %162 = vmatprep.subr.mxu0 0.0
  %163 = vmatpush1.xpose.msra.mxu0 0.0
  %164 = vmatprep.subr.mxu0 0.0
  %165 = vmatpush1.xpose.msra.mxu0 %v134
  %166 = vmatprep.subr.mxu0 0.0
  %167 = vmatpush1.xpose.msra.mxu0 %v131
  %168 = vmatprep.subr.mxu0 0.0
  %169 = vmatpush2.xpose.msra.mxu0 0.0
  %170 = vmatprep.subr.mxu0 0.0
  %171 = vmatpush2.xpose.msra.mxu0 0.0
  %172 = vmatprep.subr.mxu0 0.0
  %173 = vmatpush2.xpose.msra.mxu0 0.0
  %174 = vmatprep.subr.mxu0 0.0
  %175 = vmatpush2.xpose.msra.mxu0 0.0
  %176 = vmatprep.subr.mxu0 0.0
  %177 = vmatpush2.xpose.msra.mxu0 0.0
  %178 = vmatprep.subr.mxu0 0.0
  %179 = vmatpush2.xpose.msra.mxu0 0.0
  %180 = vmatprep.subr.mxu0 0.0
  %181 = vmatpush2.xpose.msra.mxu0 0.0
  %182 = vmatprep.subr.mxu0 0.0
  %183 = vmatpush2.xpose.msra.mxu0 0.0
  %184 = vmatprep.subr.mxu0 0.0
  %185 = vmatpush2.xpose.msra.mxu0 0.0
  %186 = vmatprep.subr.mxu0 0.0
  %187 = vmatpush2.xpose.msra.mxu0 0.0
  %188 = vmatprep.subr.mxu0 0.0
  %189 = vmatpush2.xpose.msra.mxu0 0.0
  %190 = vmatprep.subr.mxu0 0.0
  %191 = vmatpush2.xpose.msra.mxu0 0.0
  %192 = vmatprep.subr.mxu0 0.0
  %193 = vmatpush2.xpose.msra.mxu0 0.0
  %194 = vmatprep.subr.mxu0 0.0
  %195 = vmatpush2.xpose.msra.mxu0 0.0
  %196 = vmatprep.subr.mxu0 0.0
  %197 = vmatpush2.xpose.msra.mxu0 0.0
  %198 = vmatprep.subr.mxu0 0.0
  %199 = vmatpush2.xpose.msra.mxu0 0.0
  %200 = vmatprep.mubr.f32.mxu0 0.0
  %201 = vmatmul.mubr.f32.gmra.mxu0 %v128
  %v202 = vpop.f32.mrf.mxu0
  %v203 = vadd.f32 0.0, %v202
  %v204 = vpop.f32.mrf.mxu0
  %205 = vdwg.mxu0
  %v206 = vlaneseq
  %v207 = vshrl.u32 %v206, 7
  %v208 = vsub.s32 0, %v207
  %v209 = vrot.slane %v203, %v208
  %211 = vbcast.lane.b32.xlu0 %v209, 256
  %v212 = vpop.permute.xlu0 %211
  %s214 = sor.u32 256, 8
  %215 = vbcast.lane.b32.xlu0 %v209, %s214
  %v216 = vpop.permute.xlu0 %215
  %v217 = vlaneseq
  %v218 = vshrl.u32 %v217, 7
  %v219 = vsub.s32 1, %v218
  %v220 = vrot.slane %v203, %v219
  %222 = vbcast.lane.b32.xlu0 %v220, 256
  %v223 = vpop.permute.xlu0 %222
  %s225 = sor.u32 256, 8
  %226 = vbcast.lane.b32.xlu0 %v220, %s225
  %v227 = vpop.permute.xlu0 %226
  %v228 = vlaneseq
  %v229 = vshrl.u32 %v228, 7
  %v230 = vsub.s32 2, %v229
  %v231 = vrot.slane %v203, %v230
  %233 = vbcast.lane.b32.xlu0 %v231, 256
  %v234 = vpop.permute.xlu0 %233
  %s236 = sor.u32 256, 8
  %237 = vbcast.lane.b32.xlu0 %v231, %s236
  %v238 = vpop.permute.xlu0 %237
  %v239 = vlaneseq
  %v240 = vshrl.u32 %v239, 7
  %v241 = vsub.s32 3, %v240
  %v242 = vrot.slane %v203, %v241
  %244 = vbcast.lane.b32.xlu0 %v242, 256
  %v245 = vpop.permute.xlu0 %244
  %s247 = sor.u32 256, 8
  %248 = vbcast.lane.b32.xlu0 %v242, %s247
  %v249 = vpop.permute.xlu0 %248
  %v251 = vcombine.high %v203, %v203
  %v253 = vunpack.c.l.s4 1966171168
  %v254 = vunpack.c.0.s8 %v253
  %v255 = vlaneseq
  %v256 = vshrl.u32 %v255, 7
  %v257 = vsub.s32 %v254, %v256
  %v258 = vrot.slane %v251, %v257
  %v259 = vcombine.high %v258, %v258
  %v261 = vunpack.c.l.s4 1966171168
  %v262 = vunpack.c.0.s8 %v261
  %v263 = vlaneseq
  %v264 = vshrl.u32 %v263, 7
  %v265 = vsub.s32 %v262, %v264
  %v266 = vrot.slane %v258, %v265
  %v268 = vunpack.c.l.s4 1966171168
  %v269 = vunpack.c.0.s8 %v268
  %v270 = vlaneseq
  %v271 = vshrl.u32 %v270, 7
  %v272 = vsub.s32 %v269, %v271
  %v273 = vrot.slane %v259, %v272
  %v274 = vcombine.high %v266, %v266
  %v275 = vcombine.high %v273, %v273
  %v276 = vlaneseq
  %v277 = vshrl.u32 %v276, 7
  %v278 = vsub.s32 0, %v277
  %v279 = vrot.slane %v266, %v278
  %v280 = vlaneseq
  %v281 = vshrl.u32 %v280, 7
  %v282 = vsub.s32 0, %v281
  %v283 = vrot.slane %v273, %v282
  %v284 = vlaneseq
  %v285 = vshrl.u32 %v284, 7
  %v286 = vsub.s32 0, %v285
  %v287 = vrot.slane %v274, %v286
  %v288 = vlaneseq
  %v289 = vshrl.u32 %v288, 7
  %v290 = vsub.s32 0, %v289
  %v291 = vrot.slane %v275, %v290
  %v296 = vadd.f32 %v212, %v279
  %v297 = vadd.f32 %v216, %v279
  %v298 = vadd.f32 %v223, %v283
  %v299 = vadd.f32 %v227, %v283
  %v300 = vadd.f32 %v234, %v287
  %v301 = vadd.f32 %v238, %v287
  %v302 = vadd.f32 %v245, %v291
  %v303 = vadd.f32 %v249, %v291
  %vm304 = vcmp.gt.f32.partialorder %v296, 0.0
  %vm305 = vcmp.gt.f32.partialorder %v297, 0.0
  %vm306 = vcmp.gt.f32.partialorder %v298, 0.0
  %vm307 = vcmp.gt.f32.partialorder %v299, 0.0
  %vm308 = vcmp.gt.f32.partialorder %v300, 0.0
  %vm309 = vcmp.gt.f32.partialorder %v301, 0.0
  %vm310 = vcmp.gt.f32.partialorder %v302, 0.0
  %vm311 = vcmp.gt.f32.partialorder %v303, 0.0
  %v312 = vmul.f32 %v296, 0.2
  %v313 = vmul.f32 %v297, 0.2
  %v314 = vmul.f32 %v298, 0.2
  %v315 = vmul.f32 %v299, 0.2
  %v316 = vmul.f32 %v300, 0.2
  %v317 = vmul.f32 %v301, 0.2
  %v318 = vmul.f32 %v302, 0.2
  %v319 = vmul.f32 %v303, 0.2
  %v320 = vsel %vm304, %v296, %v312
  %v321 = vsel %vm305, %v297, %v313
  %v322 = vsel %vm306, %v298, %v314
  %v323 = vsel %vm307, %v299, %v315
  %v324 = vsel %vm308, %v300, %v316
  %v325 = vsel %vm309, %v301, %v317
  %v326 = vsel %vm310, %v302, %v318
  %v327 = vsel %vm311, %v303, %v319
  %v328 = vadd.f32 %v320, %v20
  %v329 = vadd.f32 %v321, %v21
  %v330 = vadd.f32 %v322, %v20
  %v331 = vadd.f32 %v323, %v21
  %v332 = vadd.f32 %v324, %v20
  %v333 = vadd.f32 %v325, %v21
  %v334 = vadd.f32 %v326, %v20
  %v335 = vadd.f32 %v327, %v21
  %v336 = vmul.f32 %v328, 1.442695
  %v337 = vpow.pop %v336
  %v338 = vmul.f32 %v329, 1.442695
  %v339 = vpow.pop %v338
  %v340 = vmul.f32 %v330, 1.442695
  %v341 = vpow.pop %v340
  %v342 = vmul.f32 %v331, 1.442695
  %v343 = vpow.pop %v342
  %v344 = vmul.f32 %v332, 1.442695
  %v345 = vpow.pop %v344
  %v346 = vmul.f32 %v333, 1.442695
  %v347 = vpow.pop %v346
  %v348 = vmul.f32 %v334, 1.442695
  %v349 = vpow.pop %v348
  %v350 = vmul.f32 %v335, 1.442695
  %v351 = vpow.pop %v350
  %vm352 = vcmask 130048
  %v353 = vsel %vm352, %v337, 0.0
  %354 = vadd.xlane.f32.xlu0 %v353
  %v355 = vpop.xlane.xlu0 %354
  %v356 = vsel %vm352, %v339, 0.0
  %357 = vadd.xlane.f32.xlu0 %v356
  %v358 = vpop.xlane.xlu0 %357
  %v359 = vsel %vm352, %v341, 0.0
  %360 = vadd.xlane.f32.xlu0 %v359
  %v361 = vpop.xlane.xlu0 %360
  %v362 = vsel %vm352, %v343, 0.0
  %363 = vadd.xlane.f32.xlu0 %v362
  %v364 = vpop.xlane.xlu0 %363
  %v365 = vsel %vm352, %v345, 0.0
  %366 = vadd.xlane.f32.xlu0 %v365
  %v367 = vpop.xlane.xlu0 %366
  %v368 = vsel %vm352, %v347, 0.0
  %369 = vadd.xlane.f32.xlu0 %v368
  %v370 = vpop.xlane.xlu0 %369
  %v371 = vsel %vm352, %v349, 0.0
  %372 = vadd.xlane.f32.xlu0 %v371
  %v373 = vpop.xlane.xlu0 %372
  %v374 = vsel %vm352, %v351, 0.0
  %375 = vadd.xlane.f32.xlu0 %v374
  %v376 = vpop.xlane.xlu0 %375
  %v377 = vrcp.pop %v355
  %v378 = vrcp.pop %v358
  %v379 = vrcp.pop %v361
  %v380 = vrcp.pop %v364
  %v381 = vrcp.pop %v367
  %v382 = vrcp.pop %v370
  %v383 = vrcp.pop %v373
  %v384 = vrcp.pop %v376
  %v386 = vsel %vm352, %v337, 0
  %v389 = vsel %vm352, %v339, 0
  %391 = vmatprep.subr.mxu0 0.0
  %392 = vmatpush1.msra.mxu0 0.0
  %393 = vmatprep.subr.mxu0 0.0
  %394 = vmatpush1.msra.mxu0 0.0
  %395 = vmatprep.subr.mxu0 0.0
  %396 = vmatpush1.msra.mxu0 0.0
  %397 = vmatprep.subr.mxu0 0.0
  %398 = vmatpush1.msra.mxu0 0.0
  %399 = vmatprep.subr.mxu0 0.0
  %400 = vmatpush1.msra.mxu0 0.0
  %401 = vmatprep.subr.mxu0 0.0
  %402 = vmatpush1.msra.mxu0 0.0
  %403 = vmatprep.subr.mxu0 0.0
  %404 = vmatpush1.msra.mxu0 0.0
  %405 = vmatprep.subr.mxu0 0.0
  %406 = vmatpush1.msra.mxu0 0.0
  %407 = vmatprep.subr.mxu0 0.0
  %408 = vmatpush1.msra.mxu0 0.0
  %409 = vmatprep.subr.mxu0 0.0
  %410 = vmatpush1.msra.mxu0 0.0
  %411 = vmatprep.subr.mxu0 0.0
  %412 = vmatpush1.msra.mxu0 0.0
  %413 = vmatprep.subr.mxu0 0.0
  %414 = vmatpush1.msra.mxu0 0.0
  %415 = vmatprep.subr.mxu0 0.0
  %416 = vmatpush1.msra.mxu0 0.0
  %417 = vmatprep.subr.mxu0 0.0
  %418 = vmatpush1.msra.mxu0 0.0
  %419 = vmatprep.subr.mxu0 0.0
  %420 = vmatpush1.msra.mxu0 %v123
  %421 = vmatprep.subr.mxu0 0.0
  %422 = vmatpush1.msra.mxu0 %v118
  %423 = vmatprep.subr.mxu0 0.0
  %424 = vmatpush2.msra.mxu0 0.0
  %425 = vmatprep.subr.mxu0 0.0
  %426 = vmatpush2.msra.mxu0 0.0
  %427 = vmatprep.subr.mxu0 0.0
  %428 = vmatpush2.msra.mxu0 0.0
  %429 = vmatprep.subr.mxu0 0.0
  %430 = vmatpush2.msra.mxu0 0.0
  %431 = vmatprep.subr.mxu0 0.0
  %432 = vmatpush2.msra.mxu0 0.0
  %433 = vmatprep.subr.mxu0 0.0
  %434 = vmatpush2.msra.mxu0 0.0
  %435 = vmatprep.subr.mxu0 0.0
  %436 = vmatpush2.msra.mxu0 0.0
  %437 = vmatprep.subr.mxu0 0.0
  %438 = vmatpush2.msra.mxu0 0.0
  %439 = vmatprep.subr.mxu0 0.0
  %440 = vmatpush2.msra.mxu0 0.0
  %441 = vmatprep.subr.mxu0 0.0
  %442 = vmatpush2.msra.mxu0 0.0
  %443 = vmatprep.subr.mxu0 0.0
  %444 = vmatpush2.msra.mxu0 0.0
  %445 = vmatprep.subr.mxu0 0.0
  %446 = vmatpush2.msra.mxu0 0.0
  %447 = vmatprep.subr.mxu0 0.0
  %448 = vmatpush2.msra.mxu0 0.0
  %449 = vmatprep.subr.mxu0 0.0
  %450 = vmatpush2.msra.mxu0 0.0
  %451 = vmatprep.subr.mxu0 0.0
  %452 = vmatpush2.msra.mxu0 0.0
  %453 = vmatprep.subr.mxu0 0.0
  %454 = vmatpush2.msra.mxu0 0.0
  %455 = vmatprep.mubr.f32.mxu0 0.0
  %456 = vmatmul.mubr.f32.gmra.mxu0 %v386
  %v457 = vpop.f32.mrf.mxu0
  %v458 = vadd.f32 0.0, %v457
  %v459 = vpop.f32.mrf.mxu0
  %460 = vmatprep.mubr.f32.mxu0 0.0
  %461 = vmatmul.mubr.f32.gmra.mxu0 %v389
  %v462 = vpop.f32.mrf.mxu0
  %v463 = vadd.f32 0.0, %v462
  %v464 = vpop.f32.mrf.mxu0
  %465 = vdwg.mxu0
  %v466 = vmul.f32 %v458, %v377
  %v467 = vmul.f32 %v463, %v378
  %v468 = vlaneseq
  %v469 = vshrl.u32 %v468, 7
  %v470 = vsub.s32 0, %v469
  %v471 = vrot.slane %v25, %v470
  %v472 = vadd.f32 %v466, %v471
  %v473 = vadd.f32 %v467, %v471
  %vm474 = vcmp.gt.f32.partialorder %v472, 0.0
  %vm475 = vcmp.gt.f32.partialorder %v473, 0.0
  %v476 = vmin.f32 %v472, 0.0
  %v477 = vmin.f32 %v473, 0.0
  %v478 = vmul.f32 %v476, 1.442695
  %v479 = vpow.pop %v478
  %v480 = vmul.f32 %v477, 1.442695
  %v481 = vpow.pop %v480
  %v482 = vsub.f32 %v479, 1.0
  %v483 = vsub.f32 %v481, 1.0
  %v484 = vsel %vm474, %v472, %v482
  %v485 = vsel %vm475, %v473, %v483
  %486 = vrot.lane.b32.xlu0 %v118, 112
  %v487 = vpop.permute.xlu0 %486
  %488 = vrot.lane.b32.xlu0 %v123, 112
  %v489 = vpop.permute.xlu0 %488
  %v493 = vsel %vm352, %v341, 0
  %v496 = vsel %vm352, %v343, 0
  %498 = vmatprep.subr.mxu0 0.0
  %499 = vmatpush1.msra.mxu0 0.0
  %500 = vmatprep.subr.mxu0 0.0
  %501 = vmatpush1.msra.mxu0 0.0
  %502 = vmatprep.subr.mxu0 0.0
  %503 = vmatpush1.msra.mxu0 0.0
  %504 = vmatprep.subr.mxu0 0.0
  %505 = vmatpush1.msra.mxu0 0.0
  %506 = vmatprep.subr.mxu0 0.0
  %507 = vmatpush1.msra.mxu0 0.0
  %508 = vmatprep.subr.mxu0 0.0
  %509 = vmatpush1.msra.mxu0 0.0
  %510 = vmatprep.subr.mxu0 0.0
  %511 = vmatpush1.msra.mxu0 0.0
  %512 = vmatprep.subr.mxu0 0.0
  %513 = vmatpush1.msra.mxu0 0.0
  %514 = vmatprep.subr.mxu0 0.0
  %515 = vmatpush1.msra.mxu0 0.0
  %516 = vmatprep.subr.mxu0 0.0
  %517 = vmatpush1.msra.mxu0 0.0
  %518 = vmatprep.subr.mxu0 0.0
  %519 = vmatpush1.msra.mxu0 0.0
  %520 = vmatprep.subr.mxu0 0.0
  %521 = vmatpush1.msra.mxu0 0.0
  %522 = vmatprep.subr.mxu0 0.0
  %523 = vmatpush1.msra.mxu0 0.0
  %524 = vmatprep.subr.mxu0 0.0
  %525 = vmatpush1.msra.mxu0 0.0
  %526 = vmatprep.subr.mxu0 0.0
  %527 = vmatpush1.msra.mxu0 %v489
  %528 = vmatprep.subr.mxu0 0.0
  %529 = vmatpush1.msra.mxu0 %v487
  %530 = vmatprep.subr.mxu0 0.0
  %531 = vmatpush2.msra.mxu0 0.0
  %532 = vmatprep.subr.mxu0 0.0
  %533 = vmatpush2.msra.mxu0 0.0
  %534 = vmatprep.subr.mxu0 0.0
  %535 = vmatpush2.msra.mxu0 0.0
  %536 = vmatprep.subr.mxu0 0.0
  %537 = vmatpush2.msra.mxu0 0.0
  %538 = vmatprep.subr.mxu0 0.0
  %539 = vmatpush2.msra.mxu0 0.0
  %540 = vmatprep.subr.mxu0 0.0
  %541 = vmatpush2.msra.mxu0 0.0
  %542 = vmatprep.subr.mxu0 0.0
  %543 = vmatpush2.msra.mxu0 0.0
  %544 = vmatprep.subr.mxu0 0.0
  %545 = vmatpush2.msra.mxu0 0.0
  %546 = vmatprep.subr.mxu0 0.0
  %547 = vmatpush2.msra.mxu0 0.0
  %548 = vmatprep.subr.mxu0 0.0
  %549 = vmatpush2.msra.mxu0 0.0
  %550 = vmatprep.subr.mxu0 0.0
  %551 = vmatpush2.msra.mxu0 0.0
  %552 = vmatprep.subr.mxu0 0.0
  %553 = vmatpush2.msra.mxu0 0.0
  %554 = vmatprep.subr.mxu0 0.0
  %555 = vmatpush2.msra.mxu0 0.0
  %556 = vmatprep.subr.mxu0 0.0
  %557 = vmatpush2.msra.mxu0 0.0
  %558 = vmatprep.subr.mxu0 0.0
  %559 = vmatpush2.msra.mxu0 0.0
  %560 = vmatprep.subr.mxu0 0.0
  %561 = vmatpush2.msra.mxu0 0.0
  %562 = vmatprep.mubr.f32.mxu0 0.0
  %563 = vmatmul.mubr.f32.gmra.mxu0 %v493
  %v564 = vpop.f32.mrf.mxu0
  %v565 = vadd.f32 0.0, %v564
  %v566 = vpop.f32.mrf.mxu0
  %567 = vmatprep.mubr.f32.mxu0 0.0
  %568 = vmatmul.mubr.f32.gmra.mxu0 %v496
  %v569 = vpop.f32.mrf.mxu0
  %v570 = vadd.f32 0.0, %v569
  %v571 = vpop.f32.mrf.mxu0
  %572 = vdwg.mxu0
  %v573 = vmul.f32 %v565, %v379
  %v574 = vmul.f32 %v570, %v380
  %576 = vrot.lane.b32.xlu0 %v471, 112
  %v577 = vpop.permute.xlu0 %576
  %v579 = vadd.f32 %v573, %v577
  %v580 = vadd.f32 %v574, %v577
  %vm581 = vcmp.gt.f32.partialorder %v579, 0.0
  %vm582 = vcmp.gt.f32.partialorder %v580, 0.0
  %v583 = vmin.f32 %v579, 0.0
  %v584 = vmin.f32 %v580, 0.0
  %v585 = vmul.f32 %v583, 1.442695
  %v586 = vpow.pop %v585
  %v587 = vmul.f32 %v584, 1.442695
  %v588 = vpow.pop %v587
  %v589 = vsub.f32 %v586, 1.0
  %v590 = vsub.f32 %v588, 1.0
  %v591 = vsel %vm581, %v579, %v589
  %v592 = vsel %vm582, %v580, %v590
  %v594 = vsel %vm352, %v591, 0
  %v597 = vsel %vm352, %v592, 0
  %599 = vmatprep.subr.mxu0 0.0
  %600 = vmatpush1.msra.mxu0 0.0
  %601 = vmatprep.subr.mxu0 0.0
  %602 = vmatpush1.msra.mxu0 0.0
  %603 = vmatprep.subr.mxu0 0.0
  %604 = vmatpush1.msra.mxu0 0.0
  %605 = vmatprep.subr.mxu0 0.0
  %606 = vmatpush1.msra.mxu0 0.0
  %607 = vmatprep.subr.mxu0 0.0
  %608 = vmatpush1.msra.mxu0 0.0
  %609 = vmatprep.subr.mxu0 0.0
  %610 = vmatpush1.msra.mxu0 0.0
  %611 = vmatprep.subr.mxu0 0.0
  %612 = vmatpush1.msra.mxu0 0.0
  %613 = vmatprep.subr.mxu0 0.0
  %614 = vmatpush1.msra.mxu0 0.0
  %615 = vmatprep.subr.mxu0 0.0
  %616 = vmatpush1.msra.mxu0 0.0
  %617 = vmatprep.subr.mxu0 0.0
  %618 = vmatpush1.msra.mxu0 0.0
  %619 = vmatprep.subr.mxu0 0.0
  %620 = vmatpush1.msra.mxu0 0.0
  %621 = vmatprep.subr.mxu0 0.0
  %622 = vmatpush1.msra.mxu0 0.0
  %623 = vmatprep.subr.mxu0 0.0
  %624 = vmatpush1.msra.mxu0 0.0
  %625 = vmatprep.subr.mxu0 0.0
  %626 = vmatpush1.msra.mxu0 0.0
  %627 = vmatprep.subr.mxu0 0.0
  %628 = vmatpush1.msra.mxu0 %v29
  %629 = vmatprep.subr.mxu0 0.0
  %630 = vmatpush1.msra.mxu0 %v28
  %631 = vmatprep.subr.mxu0 0.0
  %632 = vmatpush2.msra.mxu0 0.0
  %633 = vmatprep.subr.mxu0 0.0
  %634 = vmatpush2.msra.mxu0 0.0
  %635 = vmatprep.subr.mxu0 0.0
  %636 = vmatpush2.msra.mxu0 0.0
  %637 = vmatprep.subr.mxu0 0.0
  %638 = vmatpush2.msra.mxu0 0.0
  %639 = vmatprep.subr.mxu0 0.0
  %640 = vmatpush2.msra.mxu0 0.0
  %641 = vmatprep.subr.mxu0 0.0
  %642 = vmatpush2.msra.mxu0 0.0
  %643 = vmatprep.subr.mxu0 0.0
  %644 = vmatpush2.msra.mxu0 0.0
  %645 = vmatprep.subr.mxu0 0.0
  %646 = vmatpush2.msra.mxu0 0.0
  %647 = vmatprep.subr.mxu0 0.0
  %648 = vmatpush2.msra.mxu0 0.0
  %649 = vmatprep.subr.mxu0 0.0
  %650 = vmatpush2.msra.mxu0 0.0
  %651 = vmatprep.subr.mxu0 0.0
  %652 = vmatpush2.msra.mxu0 0.0
  %653 = vmatprep.subr.mxu0 0.0
  %654 = vmatpush2.msra.mxu0 0.0
  %655 = vmatprep.subr.mxu0 0.0
  %656 = vmatpush2.msra.mxu0 0.0
  %657 = vmatprep.subr.mxu0 0.0
  %658 = vmatpush2.msra.mxu0 0.0
  %659 = vmatprep.subr.mxu0 0.0
  %660 = vmatpush2.msra.mxu0 0.0
  %661 = vmatprep.subr.mxu0 0.0
  %662 = vmatpush2.msra.mxu0 0.0
  %663 = vmatprep.mubr.f32.mxu0 0.0
  %664 = vmatmul.mubr.f32.gmra.mxu0 %v594
  %v665 = vpop.f32.mrf.mxu0
  %v666 = vadd.f32 0.0, %v665
  %v667 = vpop.f32.mrf.mxu0
  %668 = vmatprep.mubr.f32.mxu0 0.0
  %669 = vmatmul.mubr.f32.gmra.mxu0 %v597
  %v670 = vpop.f32.mrf.mxu0
  %v671 = vadd.f32 0.0, %v670
  %v672 = vpop.f32.mrf.mxu0
  %673 = vdwg.mxu0
  %v675 = vsel %vm352, %v484, 0
  %v678 = vsel %vm352, %v485, 0
  %680 = vmatprep.subr.mxu0 0.0
  %681 = vmatpush1.msra.mxu0 0.0
  %682 = vmatprep.subr.mxu0 0.0
  %683 = vmatpush1.msra.mxu0 0.0
  %684 = vmatprep.subr.mxu0 0.0
  %685 = vmatpush1.msra.mxu0 0.0
  %686 = vmatprep.subr.mxu0 0.0
  %687 = vmatpush1.msra.mxu0 0.0
  %688 = vmatprep.subr.mxu0 0.0
  %689 = vmatpush1.msra.mxu0 0.0
  %690 = vmatprep.subr.mxu0 0.0
  %691 = vmatpush1.msra.mxu0 0.0
  %692 = vmatprep.subr.mxu0 0.0
  %693 = vmatpush1.msra.mxu0 0.0
  %694 = vmatprep.subr.mxu0 0.0
  %695 = vmatpush1.msra.mxu0 0.0
  %696 = vmatprep.subr.mxu0 0.0
  %697 = vmatpush1.msra.mxu0 0.0
  %698 = vmatprep.subr.mxu0 0.0
  %699 = vmatpush1.msra.mxu0 0.0
  %700 = vmatprep.subr.mxu0 0.0
  %701 = vmatpush1.msra.mxu0 0.0
  %702 = vmatprep.subr.mxu0 0.0
  %703 = vmatpush1.msra.mxu0 0.0
  %704 = vmatprep.subr.mxu0 0.0
  %705 = vmatpush1.msra.mxu0 0.0
  %706 = vmatprep.subr.mxu0 0.0
  %707 = vmatpush1.msra.mxu0 0.0
  %708 = vmatprep.subr.mxu0 0.0
  %709 = vmatpush1.msra.mxu0 %v27
  %710 = vmatprep.subr.mxu0 0.0
  %711 = vmatpush1.msra.mxu0 %v26
  %712 = vmatprep.subr.mxu0 0.0
  %713 = vmatpush2.msra.mxu0 0.0
  %714 = vmatprep.subr.mxu0 0.0
  %715 = vmatpush2.msra.mxu0 0.0
  %716 = vmatprep.subr.mxu0 0.0
  %717 = vmatpush2.msra.mxu0 0.0
  %718 = vmatprep.subr.mxu0 0.0
  %719 = vmatpush2.msra.mxu0 0.0
  %720 = vmatprep.subr.mxu0 0.0
  %721 = vmatpush2.msra.mxu0 0.0
  %722 = vmatprep.subr.mxu0 0.0
  %723 = vmatpush2.msra.mxu0 0.0
  %724 = vmatprep.subr.mxu0 0.0
  %725 = vmatpush2.msra.mxu0 0.0
  %726 = vmatprep.subr.mxu0 0.0
  %727 = vmatpush2.msra.mxu0 0.0
  %728 = vmatprep.subr.mxu0 0.0
  %729 = vmatpush2.msra.mxu0 0.0
  %730 = vmatprep.subr.mxu0 0.0
  %731 = vmatpush2.msra.mxu0 0.0
  %732 = vmatprep.subr.mxu0 0.0
  %733 = vmatpush2.msra.mxu0 0.0
  %734 = vmatprep.subr.mxu0 0.0
  %735 = vmatpush2.msra.mxu0 0.0
  %736 = vmatprep.subr.mxu0 0.0
  %737 = vmatpush2.msra.mxu0 0.0
  %738 = vmatprep.subr.mxu0 0.0
  %739 = vmatpush2.msra.mxu0 0.0
  %740 = vmatprep.subr.mxu0 0.0
  %741 = vmatpush2.msra.mxu0 0.0
  %742 = vmatprep.subr.mxu0 0.0
  %743 = vmatpush2.msra.mxu0 0.0
  %744 = vmatprep.mubr.f32.mxu0 0.0
  %745 = vmatmul.mubr.f32.gmra.mxu0 %v675
  %v746 = vpop.f32.mrf.mxu0
  %v747 = vadd.f32 %v666, %v746
  %v748 = vpop.f32.mrf.mxu0
  %749 = vmatprep.mubr.f32.mxu0 0.0
  %750 = vmatmul.mubr.f32.gmra.mxu0 %v678
  %v751 = vpop.f32.mrf.mxu0
  %v752 = vadd.f32 %v671, %v751
  %v753 = vpop.f32.mrf.mxu0
  %754 = vdwg.mxu0
  %755 = vrot.lane.b32.xlu0 %v118, 96
  %v756 = vpop.permute.xlu0 %755
  %757 = vrot.lane.b32.xlu0 %v123, 96
  %v758 = vpop.permute.xlu0 %757
  %v762 = vsel %vm352, %v345, 0
  %v765 = vsel %vm352, %v347, 0
  %767 = vmatprep.subr.mxu0 0.0
  %768 = vmatpush1.msra.mxu0 0.0
  %769 = vmatprep.subr.mxu0 0.0
  %770 = vmatpush1.msra.mxu0 0.0
  %771 = vmatprep.subr.mxu0 0.0
  %772 = vmatpush1.msra.mxu0 0.0
  %773 = vmatprep.subr.mxu0 0.0
  %774 = vmatpush1.msra.mxu0 0.0
  %775 = vmatprep.subr.mxu0 0.0
  %776 = vmatpush1.msra.mxu0 0.0
  %777 = vmatprep.subr.mxu0 0.0
  %778 = vmatpush1.msra.mxu0 0.0
  %779 = vmatprep.subr.mxu0 0.0
  %780 = vmatpush1.msra.mxu0 0.0
  %781 = vmatprep.subr.mxu0 0.0
  %782 = vmatpush1.msra.mxu0 0.0
  %783 = vmatprep.subr.mxu0 0.0
  %784 = vmatpush1.msra.mxu0 0.0
  %785 = vmatprep.subr.mxu0 0.0
  %786 = vmatpush1.msra.mxu0 0.0
  %787 = vmatprep.subr.mxu0 0.0
  %788 = vmatpush1.msra.mxu0 0.0
  %789 = vmatprep.subr.mxu0 0.0
  %790 = vmatpush1.msra.mxu0 0.0
  %791 = vmatprep.subr.mxu0 0.0
  %792 = vmatpush1.msra.mxu0 0.0
  %793 = vmatprep.subr.mxu0 0.0
  %794 = vmatpush1.msra.mxu0 0.0
  %795 = vmatprep.subr.mxu0 0.0
  %796 = vmatpush1.msra.mxu0 %v758
  %797 = vmatprep.subr.mxu0 0.0
  %798 = vmatpush1.msra.mxu0 %v756
  %799 = vmatprep.subr.mxu0 0.0
  %800 = vmatpush2.msra.mxu0 0.0
  %801 = vmatprep.subr.mxu0 0.0
  %802 = vmatpush2.msra.mxu0 0.0
  %803 = vmatprep.subr.mxu0 0.0
  %804 = vmatpush2.msra.mxu0 0.0
  %805 = vmatprep.subr.mxu0 0.0
  %806 = vmatpush2.msra.mxu0 0.0
  %807 = vmatprep.subr.mxu0 0.0
  %808 = vmatpush2.msra.mxu0 0.0
  %809 = vmatprep.subr.mxu0 0.0
  %810 = vmatpush2.msra.mxu0 0.0
  %811 = vmatprep.subr.mxu0 0.0
  %812 = vmatpush2.msra.mxu0 0.0
  %813 = vmatprep.subr.mxu0 0.0
  %814 = vmatpush2.msra.mxu0 0.0
  %815 = vmatprep.subr.mxu0 0.0
  %816 = vmatpush2.msra.mxu0 0.0
  %817 = vmatprep.subr.mxu0 0.0
  %818 = vmatpush2.msra.mxu0 0.0
  %819 = vmatprep.subr.mxu0 0.0
  %820 = vmatpush2.msra.mxu0 0.0
  %821 = vmatprep.subr.mxu0 0.0
  %822 = vmatpush2.msra.mxu0 0.0
  %823 = vmatprep.subr.mxu0 0.0
  %824 = vmatpush2.msra.mxu0 0.0
  %825 = vmatprep.subr.mxu0 0.0
  %826 = vmatpush2.msra.mxu0 0.0
  %827 = vmatprep.subr.mxu0 0.0
  %828 = vmatpush2.msra.mxu0 0.0
  %829 = vmatprep.subr.mxu0 0.0
  %830 = vmatpush2.msra.mxu0 0.0
  %831 = vmatprep.mubr.f32.mxu0 0.0
  %832 = vmatmul.mubr.f32.gmra.mxu0 %v762
  %v833 = vpop.f32.mrf.mxu0
  %v834 = vadd.f32 0.0, %v833
  %v835 = vpop.f32.mrf.mxu0
  %836 = vmatprep.mubr.f32.mxu0 0.0
  %837 = vmatmul.mubr.f32.gmra.mxu0 %v765
  %v838 = vpop.f32.mrf.mxu0
  %v839 = vadd.f32 0.0, %v838
  %v840 = vpop.f32.mrf.mxu0
  %841 = vdwg.mxu0
  %v842 = vmul.f32 %v834, %v381
  %v843 = vmul.f32 %v839, %v382
  %844 = vrot.lane.b32.xlu0 %v471, 96
  %v845 = vpop.permute.xlu0 %844
  %v847 = vadd.f32 %v842, %v845
  %v848 = vadd.f32 %v843, %v845
  %vm849 = vcmp.gt.f32.partialorder %v847, 0.0
  %vm850 = vcmp.gt.f32.partialorder %v848, 0.0
  %v851 = vmin.f32 %v847, 0.0
  %v852 = vmin.f32 %v848, 0.0
  %v853 = vmul.f32 %v851, 1.442695
  %v854 = vpow.pop %v853
  %v855 = vmul.f32 %v852, 1.442695
  %v856 = vpow.pop %v855
  %v857 = vsub.f32 %v854, 1.0
  %v858 = vsub.f32 %v856, 1.0
  %v859 = vsel %vm849, %v847, %v857
  %v860 = vsel %vm850, %v848, %v858
  %v862 = vsel %vm352, %v859, 0
  %v865 = vsel %vm352, %v860, 0
  %867 = vmatprep.subr.mxu0 0.0
  %868 = vmatpush1.msra.mxu0 0.0
  %869 = vmatprep.subr.mxu0 0.0
  %870 = vmatpush1.msra.mxu0 0.0
  %871 = vmatprep.subr.mxu0 0.0
  %872 = vmatpush1.msra.mxu0 0.0
  %873 = vmatprep.subr.mxu0 0.0
  %874 = vmatpush1.msra.mxu0 0.0
  %875 = vmatprep.subr.mxu0 0.0
  %876 = vmatpush1.msra.mxu0 0.0
  %877 = vmatprep.subr.mxu0 0.0
  %878 = vmatpush1.msra.mxu0 0.0
  %879 = vmatprep.subr.mxu0 0.0
  %880 = vmatpush1.msra.mxu0 0.0
  %881 = vmatprep.subr.mxu0 0.0
  %882 = vmatpush1.msra.mxu0 0.0
  %883 = vmatprep.subr.mxu0 0.0
  %884 = vmatpush1.msra.mxu0 0.0
  %885 = vmatprep.subr.mxu0 0.0
  %886 = vmatpush1.msra.mxu0 0.0
  %887 = vmatprep.subr.mxu0 0.0
  %888 = vmatpush1.msra.mxu0 0.0
  %889 = vmatprep.subr.mxu0 0.0
  %890 = vmatpush1.msra.mxu0 0.0
  %891 = vmatprep.subr.mxu0 0.0
  %892 = vmatpush1.msra.mxu0 0.0
  %893 = vmatprep.subr.mxu0 0.0
  %894 = vmatpush1.msra.mxu0 0.0
  %895 = vmatprep.subr.mxu0 0.0
  %896 = vmatpush1.msra.mxu0 %v31
  %897 = vmatprep.subr.mxu0 0.0
  %898 = vmatpush1.msra.mxu0 %v30
  %899 = vmatprep.subr.mxu0 0.0
  %900 = vmatpush2.msra.mxu0 0.0
  %901 = vmatprep.subr.mxu0 0.0
  %902 = vmatpush2.msra.mxu0 0.0
  %903 = vmatprep.subr.mxu0 0.0
  %904 = vmatpush2.msra.mxu0 0.0
  %905 = vmatprep.subr.mxu0 0.0
  %906 = vmatpush2.msra.mxu0 0.0
  %907 = vmatprep.subr.mxu0 0.0
  %908 = vmatpush2.msra.mxu0 0.0
  %909 = vmatprep.subr.mxu0 0.0
  %910 = vmatpush2.msra.mxu0 0.0
  %911 = vmatprep.subr.mxu0 0.0
  %912 = vmatpush2.msra.mxu0 0.0
  %913 = vmatprep.subr.mxu0 0.0
  %914 = vmatpush2.msra.mxu0 0.0
  %915 = vmatprep.subr.mxu0 0.0
  %916 = vmatpush2.msra.mxu0 0.0
  %917 = vmatprep.subr.mxu0 0.0
  %918 = vmatpush2.msra.mxu0 0.0
  %919 = vmatprep.subr.mxu0 0.0
  %920 = vmatpush2.msra.mxu0 0.0
  %921 = vmatprep.subr.mxu0 0.0
  %922 = vmatpush2.msra.mxu0 0.0
  %923 = vmatprep.subr.mxu0 0.0
  %924 = vmatpush2.msra.mxu0 0.0
  %925 = vmatprep.subr.mxu0 0.0
  %926 = vmatpush2.msra.mxu0 0.0
  %927 = vmatprep.subr.mxu0 0.0
  %928 = vmatpush2.msra.mxu0 0.0
  %929 = vmatprep.subr.mxu0 0.0
  %930 = vmatpush2.msra.mxu0 0.0
  %931 = vmatprep.mubr.f32.mxu0 0.0
  %932 = vmatmul.mubr.f32.gmra.mxu0 %v862
  %v933 = vpop.f32.mrf.mxu0
  %v934 = vadd.f32 0.0, %v933
  %v935 = vpop.f32.mrf.mxu0
  %936 = vmatprep.mubr.f32.mxu0 0.0
  %937 = vmatmul.mubr.f32.gmra.mxu0 %v865
  %v938 = vpop.f32.mrf.mxu0
  %v939 = vadd.f32 0.0, %v938
  %v940 = vpop.f32.mrf.mxu0
  %941 = vdwg.mxu0
  %v942 = vadd.f32 %v747, %v934
  %v943 = vadd.f32 %v752, %v939
  %944 = vrot.lane.b32.xlu0 %v118, 80
  %v945 = vpop.permute.xlu0 %944
  %946 = vrot.lane.b32.xlu0 %v123, 80
  %v947 = vpop.permute.xlu0 %946
  %v951 = vsel %vm352, %v349, 0
  %v954 = vsel %vm352, %v351, 0
  %956 = vmatprep.subr.mxu0 0.0
  %957 = vmatpush1.msra.mxu0 0.0
  %958 = vmatprep.subr.mxu0 0.0
  %959 = vmatpush1.msra.mxu0 0.0
  %960 = vmatprep.subr.mxu0 0.0
  %961 = vmatpush1.msra.mxu0 0.0
  %962 = vmatprep.subr.mxu0 0.0
  %963 = vmatpush1.msra.mxu0 0.0
  %964 = vmatprep.subr.mxu0 0.0
  %965 = vmatpush1.msra.mxu0 0.0
  %966 = vmatprep.subr.mxu0 0.0
  %967 = vmatpush1.msra.mxu0 0.0
  %968 = vmatprep.subr.mxu0 0.0
  %969 = vmatpush1.msra.mxu0 0.0
  %970 = vmatprep.subr.mxu0 0.0
  %971 = vmatpush1.msra.mxu0 0.0
  %972 = vmatprep.subr.mxu0 0.0
  %973 = vmatpush1.msra.mxu0 0.0
  %974 = vmatprep.subr.mxu0 0.0
  %975 = vmatpush1.msra.mxu0 0.0
  %976 = vmatprep.subr.mxu0 0.0
  %977 = vmatpush1.msra.mxu0 0.0
  %978 = vmatprep.subr.mxu0 0.0
  %979 = vmatpush1.msra.mxu0 0.0
  %980 = vmatprep.subr.mxu0 0.0
  %981 = vmatpush1.msra.mxu0 0.0
  %982 = vmatprep.subr.mxu0 0.0
  %983 = vmatpush1.msra.mxu0 0.0
  %984 = vmatprep.subr.mxu0 0.0
  %985 = vmatpush1.msra.mxu0 %v947
  %986 = vmatprep.subr.mxu0 0.0
  %987 = vmatpush1.msra.mxu0 %v945
  %988 = vmatprep.subr.mxu0 0.0
  %989 = vmatpush2.msra.mxu0 0.0
  %990 = vmatprep.subr.mxu0 0.0
  %991 = vmatpush2.msra.mxu0 0.0
  %992 = vmatprep.subr.mxu0 0.0
  %993 = vmatpush2.msra.mxu0 0.0
  %994 = vmatprep.subr.mxu0 0.0
  %995 = vmatpush2.msra.mxu0 0.0
  %996 = vmatprep.subr.mxu0 0.0
  %997 = vmatpush2.msra.mxu0 0.0
  %998 = vmatprep.subr.mxu0 0.0
  %999 = vmatpush2.msra.mxu0 0.0
  %1000 = vmatprep.subr.mxu0 0.0
  %1001 = vmatpush2.msra.mxu0 0.0
  %1002 = vmatprep.subr.mxu0 0.0
  %1003 = vmatpush2.msra.mxu0 0.0
  %1004 = vmatprep.subr.mxu0 0.0
  %1005 = vmatpush2.msra.mxu0 0.0
  %1006 = vmatprep.subr.mxu0 0.0
  %1007 = vmatpush2.msra.mxu0 0.0
  %1008 = vmatprep.subr.mxu0 0.0
  %1009 = vmatpush2.msra.mxu0 0.0
  %1010 = vmatprep.subr.mxu0 0.0
  %1011 = vmatpush2.msra.mxu0 0.0
  %1012 = vmatprep.subr.mxu0 0.0
  %1013 = vmatpush2.msra.mxu0 0.0
  %1014 = vmatprep.subr.mxu0 0.0
  %1015 = vmatpush2.msra.mxu0 0.0
  %1016 = vmatprep.subr.mxu0 0.0
  %1017 = vmatpush2.msra.mxu0 0.0
  %1018 = vmatprep.subr.mxu0 0.0
  %1019 = vmatpush2.msra.mxu0 0.0
  %1020 = vmatprep.mubr.f32.mxu0 0.0
  %1021 = vmatmul.mubr.f32.gmra.mxu0 %v951
  %v1022 = vpop.f32.mrf.mxu0
  %v1023 = vadd.f32 0.0, %v1022
  %v1024 = vpop.f32.mrf.mxu0
  %1025 = vmatprep.mubr.f32.mxu0 0.0
  %1026 = vmatmul.mubr.f32.gmra.mxu0 %v954
  %v1027 = vpop.f32.mrf.mxu0
  %v1028 = vadd.f32 0.0, %v1027
  %v1029 = vpop.f32.mrf.mxu0
  %1030 = vdwg.mxu0
  %v1031 = vmul.f32 %v1023, %v383
  %v1032 = vmul.f32 %v1028, %v384
  %1033 = vrot.lane.b32.xlu0 %v471, 80
  %v1034 = vpop.permute.xlu0 %1033
  %v1036 = vadd.f32 %v1031, %v1034
  %v1037 = vadd.f32 %v1032, %v1034
  %vm1038 = vcmp.gt.f32.partialorder %v1036, 0.0
  %vm1039 = vcmp.gt.f32.partialorder %v1037, 0.0
  %v1040 = vmin.f32 %v1036, 0.0
  %v1041 = vmin.f32 %v1037, 0.0
  %v1042 = vmul.f32 %v1040, 1.442695
  %v1043 = vpow.pop %v1042
  %v1044 = vmul.f32 %v1041, 1.442695
  %v1045 = vpow.pop %v1044
  %v1046 = vsub.f32 %v1043, 1.0
  %v1047 = vsub.f32 %v1045, 1.0
  %v1048 = vsel %vm1038, %v1036, %v1046
  %v1049 = vsel %vm1039, %v1037, %v1047
  %v1051 = vsel %vm352, %v1048, 0
  %v1054 = vsel %vm352, %v1049, 0
  %1056 = vmatprep.subr.mxu0 0.0
  %1057 = vmatpush1.msra.mxu0 0.0
  %1058 = vmatprep.subr.mxu0 0.0
  %1059 = vmatpush1.msra.mxu0 0.0
  %1060 = vmatprep.subr.mxu0 0.0
  %1061 = vmatpush1.msra.mxu0 0.0
  %1062 = vmatprep.subr.mxu0 0.0
  %1063 = vmatpush1.msra.mxu0 0.0
  %1064 = vmatprep.subr.mxu0 0.0
  %1065 = vmatpush1.msra.mxu0 0.0
  %1066 = vmatprep.subr.mxu0 0.0
  %1067 = vmatpush1.msra.mxu0 0.0
  %1068 = vmatprep.subr.mxu0 0.0
  %1069 = vmatpush1.msra.mxu0 0.0
  %1070 = vmatprep.subr.mxu0 0.0
  %1071 = vmatpush1.msra.mxu0 0.0
  %1072 = vmatprep.subr.mxu0 0.0
  %1073 = vmatpush1.msra.mxu0 0.0
  %1074 = vmatprep.subr.mxu0 0.0
  %1075 = vmatpush1.msra.mxu0 0.0
  %1076 = vmatprep.subr.mxu0 0.0
  %1077 = vmatpush1.msra.mxu0 0.0
  %1078 = vmatprep.subr.mxu0 0.0
  %1079 = vmatpush1.msra.mxu0 0.0
  %1080 = vmatprep.subr.mxu0 0.0
  %1081 = vmatpush1.msra.mxu0 0.0
  %1082 = vmatprep.subr.mxu0 0.0
  %1083 = vmatpush1.msra.mxu0 0.0
  %1084 = vmatprep.subr.mxu0 0.0
  %1085 = vmatpush1.msra.mxu0 %v33
  %1086 = vmatprep.subr.mxu0 0.0
  %1087 = vmatpush1.msra.mxu0 %v32
  %1088 = vmatprep.subr.mxu0 0.0
  %1089 = vmatpush2.msra.mxu0 0.0
  %1090 = vmatprep.subr.mxu0 0.0
  %1091 = vmatpush2.msra.mxu0 0.0
  %1092 = vmatprep.subr.mxu0 0.0
  %1093 = vmatpush2.msra.mxu0 0.0
  %1094 = vmatprep.subr.mxu0 0.0
  %1095 = vmatpush2.msra.mxu0 0.0
  %1096 = vmatprep.subr.mxu0 0.0
  %1097 = vmatpush2.msra.mxu0 0.0
  %1098 = vmatprep.subr.mxu0 0.0
  %1099 = vmatpush2.msra.mxu0 0.0
  %1100 = vmatprep.subr.mxu0 0.0
  %1101 = vmatpush2.msra.mxu0 0.0
  %1102 = vmatprep.subr.mxu0 0.0
  %1103 = vmatpush2.msra.mxu0 0.0
  %1104 = vmatprep.subr.mxu0 0.0
  %1105 = vmatpush2.msra.mxu0 0.0
  %1106 = vmatprep.subr.mxu0 0.0
  %1107 = vmatpush2.msra.mxu0 0.0
  %1108 = vmatprep.subr.mxu0 0.0
  %1109 = vmatpush2.msra.mxu0 0.0
  %1110 = vmatprep.subr.mxu0 0.0
  %1111 = vmatpush2.msra.mxu0 0.0
  %1112 = vmatprep.subr.mxu0 0.0
  %1113 = vmatpush2.msra.mxu0 0.0
  %1114 = vmatprep.subr.mxu0 0.0
  %1115 = vmatpush2.msra.mxu0 0.0
  %1116 = vmatprep.subr.mxu0 0.0
  %1117 = vmatpush2.msra.mxu0 0.0
  %1118 = vmatprep.subr.mxu0 0.0
  %1119 = vmatpush2.msra.mxu0 0.0
  %1120 = vmatprep.mubr.f32.mxu0 0.0
  %1121 = vmatmul.mubr.f32.gmra.mxu0 %v1051
  %v1122 = vpop.f32.mrf.mxu0
  %v1123 = vadd.f32 0.0, %v1122
  %v1124 = vpop.f32.mrf.mxu0
  %1125 = vmatprep.mubr.f32.mxu0 0.0
  %1126 = vmatmul.mubr.f32.gmra.mxu0 %v1054
  %v1127 = vpop.f32.mrf.mxu0
  %v1128 = vadd.f32 0.0, %v1127
  %v1129 = vpop.f32.mrf.mxu0
  %1130 = vdwg.mxu0
  %v1131 = vadd.f32 %v942, %v1123
  %v1132 = vadd.f32 %v943, %v1128
  %vm1133 = vcmask 261120
  %v1135 = vsel %vm1133, %v34, 0
  %v1138 = vsel %vm1133, %v1131, 0
  %v1141 = vsel %vm1133, %v1132, 0
  %1143 = vmatprep.subr.mxu0 0.0
  %1144 = vmatpush1.xpose.msra.mxu0 0.0
  %1145 = vmatprep.subr.mxu0 0.0
  %1146 = vmatpush1.xpose.msra.mxu0 0.0
  %1147 = vmatprep.subr.mxu0 0.0
  %1148 = vmatpush1.xpose.msra.mxu0 0.0
  %1149 = vmatprep.subr.mxu0 0.0
  %1150 = vmatpush1.xpose.msra.mxu0 0.0
  %1151 = vmatprep.subr.mxu0 0.0
  %1152 = vmatpush1.xpose.msra.mxu0 0.0
  %1153 = vmatprep.subr.mxu0 0.0
  %1154 = vmatpush1.xpose.msra.mxu0 0.0
  %1155 = vmatprep.subr.mxu0 0.0
  %1156 = vmatpush1.xpose.msra.mxu0 0.0
  %1157 = vmatprep.subr.mxu0 0.0
  %1158 = vmatpush1.xpose.msra.mxu0 0.0
  %1159 = vmatprep.subr.mxu0 0.0
  %1160 = vmatpush1.xpose.msra.mxu0 0.0
  %1161 = vmatprep.subr.mxu0 0.0
  %1162 = vmatpush1.xpose.msra.mxu0 0.0
  %1163 = vmatprep.subr.mxu0 0.0
  %1164 = vmatpush1.xpose.msra.mxu0 0.0
  %1165 = vmatprep.subr.mxu0 0.0
  %1166 = vmatpush1.xpose.msra.mxu0 0.0
  %1167 = vmatprep.subr.mxu0 0.0
  %1168 = vmatpush1.xpose.msra.mxu0 0.0
  %1169 = vmatprep.subr.mxu0 0.0
  %1170 = vmatpush1.xpose.msra.mxu0 0.0
  %1171 = vmatprep.subr.mxu0 0.0
  %1172 = vmatpush1.xpose.msra.mxu0 %v1141
  %1173 = vmatprep.subr.mxu0 0.0
  %1174 = vmatpush1.xpose.msra.mxu0 %v1138
  %1175 = vmatprep.subr.mxu0 0.0
  %1176 = vmatpush2.xpose.msra.mxu0 0.0
  %1177 = vmatprep.subr.mxu0 0.0
  %1178 = vmatpush2.xpose.msra.mxu0 0.0
  %1179 = vmatprep.subr.mxu0 0.0
  %1180 = vmatpush2.xpose.msra.mxu0 0.0
  %1181 = vmatprep.subr.mxu0 0.0
  %1182 = vmatpush2.xpose.msra.mxu0 0.0
  %1183 = vmatprep.subr.mxu0 0.0
  %1184 = vmatpush2.xpose.msra.mxu0 0.0
  %1185 = vmatprep.subr.mxu0 0.0
  %1186 = vmatpush2.xpose.msra.mxu0 0.0
  %1187 = vmatprep.subr.mxu0 0.0
  %1188 = vmatpush2.xpose.msra.mxu0 0.0
  %1189 = vmatprep.subr.mxu0 0.0
  %1190 = vmatpush2.xpose.msra.mxu0 0.0
  %1191 = vmatprep.subr.mxu0 0.0
  %1192 = vmatpush2.xpose.msra.mxu0 0.0
  %1193 = vmatprep.subr.mxu0 0.0
  %1194 = vmatpush2.xpose.msra.mxu0 0.0
  %1195 = vmatprep.subr.mxu0 0.0
  %1196 = vmatpush2.xpose.msra.mxu0 0.0
  %1197 = vmatprep.subr.mxu0 0.0
  %1198 = vmatpush2.xpose.msra.mxu0 0.0
  %1199 = vmatprep.subr.mxu0 0.0
  %1200 = vmatpush2.xpose.msra.mxu0 0.0
  %1201 = vmatprep.subr.mxu0 0.0
  %1202 = vmatpush2.xpose.msra.mxu0 0.0
  %1203 = vmatprep.subr.mxu0 0.0
  %1204 = vmatpush2.xpose.msra.mxu0 0.0
  %1205 = vmatprep.subr.mxu0 0.0
  %1206 = vmatpush2.xpose.msra.mxu0 0.0
  %1207 = vmatprep.mubr.f32.mxu0 0.0
  %1208 = vmatmul.mubr.f32.gmra.mxu0 %v1135
  %v1209 = vpop.f32.mrf.mxu0
  %v1210 = vadd.f32 0.0, %v1209
  %v1211 = vpop.f32.mrf.mxu0
  %1212 = vdwg.mxu0
  %v1213 = vlaneseq
  %v1214 = vshrl.u32 %v1213, 7
  %v1215 = vsub.s32 0, %v1214
  %v1216 = vrot.slane %v1210, %v1215
  %1218 = vbcast.lane.b32.xlu0 %v1216, 256
  %v1219 = vpop.permute.xlu0 %1218
  %s1221 = sor.u32 256, 8
  %1222 = vbcast.lane.b32.xlu0 %v1216, %s1221
  %v1223 = vpop.permute.xlu0 %1222
  %v1224 = vlaneseq
  %v1225 = vshrl.u32 %v1224, 7
  %v1226 = vsub.s32 1, %v1225
  %v1227 = vrot.slane %v1210, %v1226
  %1229 = vbcast.lane.b32.xlu0 %v1227, 256
  %v1230 = vpop.permute.xlu0 %1229
  %s1232 = sor.u32 256, 8
  %1233 = vbcast.lane.b32.xlu0 %v1227, %s1232
  %v1234 = vpop.permute.xlu0 %1233
  %v1235 = vlaneseq
  %v1236 = vshrl.u32 %v1235, 7
  %v1237 = vsub.s32 2, %v1236
  %v1238 = vrot.slane %v1210, %v1237
  %1240 = vbcast.lane.b32.xlu0 %v1238, 256
  %v1241 = vpop.permute.xlu0 %1240
  %s1243 = sor.u32 256, 8
  %1244 = vbcast.lane.b32.xlu0 %v1238, %s1243
  %v1245 = vpop.permute.xlu0 %1244
  %v1246 = vlaneseq
  %v1247 = vshrl.u32 %v1246, 7
  %v1248 = vsub.s32 3, %v1247
  %v1249 = vrot.slane %v1210, %v1248
  %1251 = vbcast.lane.b32.xlu0 %v1249, 256
  %v1252 = vpop.permute.xlu0 %1251
  %s1254 = sor.u32 256, 8
  %1255 = vbcast.lane.b32.xlu0 %v1249, %s1254
  %v1256 = vpop.permute.xlu0 %1255
  %v1258 = vcombine.high %v1210, %v1210
  %v1260 = vunpack.c.l.s4 1966171168
  %v1261 = vunpack.c.0.s8 %v1260
  %v1262 = vlaneseq
  %v1263 = vshrl.u32 %v1262, 7
  %v1264 = vsub.s32 %v1261, %v1263
  %v1265 = vrot.slane %v1258, %v1264
  %v1266 = vcombine.high %v1265, %v1265
  %v1268 = vunpack.c.l.s4 1966171168
  %v1269 = vunpack.c.0.s8 %v1268
  %v1270 = vlaneseq
  %v1271 = vshrl.u32 %v1270, 7
  %v1272 = vsub.s32 %v1269, %v1271
  %v1273 = vrot.slane %v1265, %v1272
  %v1275 = vunpack.c.l.s4 1966171168
  %v1276 = vunpack.c.0.s8 %v1275
  %v1277 = vlaneseq
  %v1278 = vshrl.u32 %v1277, 7
  %v1279 = vsub.s32 %v1276, %v1278
  %v1280 = vrot.slane %v1266, %v1279
  %v1281 = vcombine.high %v1273, %v1273
  %v1282 = vcombine.high %v1280, %v1280
  %v1283 = vlaneseq
  %v1284 = vshrl.u32 %v1283, 7
  %v1285 = vsub.s32 0, %v1284
  %v1286 = vrot.slane %v1273, %v1285
  %v1287 = vlaneseq
  %v1288 = vshrl.u32 %v1287, 7
  %v1289 = vsub.s32 0, %v1288
  %v1290 = vrot.slane %v1280, %v1289
  %v1291 = vlaneseq
  %v1292 = vshrl.u32 %v1291, 7
  %v1293 = vsub.s32 0, %v1292
  %v1294 = vrot.slane %v1281, %v1293
  %v1295 = vlaneseq
  %v1296 = vshrl.u32 %v1295, 7
  %v1297 = vsub.s32 0, %v1296
  %v1298 = vrot.slane %v1282, %v1297
  %v1303 = vadd.f32 %v1219, %v1286
  %v1304 = vadd.f32 %v1223, %v1286
  %v1305 = vadd.f32 %v1230, %v1290
  %v1306 = vadd.f32 %v1234, %v1290
  %v1307 = vadd.f32 %v1241, %v1294
  %v1308 = vadd.f32 %v1245, %v1294
  %v1309 = vadd.f32 %v1252, %v1298
  %v1310 = vadd.f32 %v1256, %v1298
  %vm1311 = vcmp.gt.f32.partialorder %v1303, 0.0
  %vm1312 = vcmp.gt.f32.partialorder %v1304, 0.0
  %vm1313 = vcmp.gt.f32.partialorder %v1305, 0.0
  %vm1314 = vcmp.gt.f32.partialorder %v1306, 0.0
  %vm1315 = vcmp.gt.f32.partialorder %v1307, 0.0
  %vm1316 = vcmp.gt.f32.partialorder %v1308, 0.0
  %vm1317 = vcmp.gt.f32.partialorder %v1309, 0.0
  %vm1318 = vcmp.gt.f32.partialorder %v1310, 0.0
  %v1319 = vmul.f32 %v1303, 0.2
  %v1320 = vmul.f32 %v1304, 0.2
  %v1321 = vmul.f32 %v1305, 0.2
  %v1322 = vmul.f32 %v1306, 0.2
  %v1323 = vmul.f32 %v1307, 0.2
  %v1324 = vmul.f32 %v1308, 0.2
  %v1325 = vmul.f32 %v1309, 0.2
  %v1326 = vmul.f32 %v1310, 0.2
  %v1327 = vsel %vm1311, %v1303, %v1319
  %v1328 = vsel %vm1312, %v1304, %v1320
  %v1329 = vsel %vm1313, %v1305, %v1321
  %v1330 = vsel %vm1314, %v1306, %v1322
  %v1331 = vsel %vm1315, %v1307, %v1323
  %v1332 = vsel %vm1316, %v1308, %v1324
  %v1333 = vsel %vm1317, %v1309, %v1325
  %v1334 = vsel %vm1318, %v1310, %v1326
  %v1335 = vadd.f32 %v1327, %v20
  %v1336 = vadd.f32 %v1328, %v21
  %v1337 = vadd.f32 %v1329, %v20
  %v1338 = vadd.f32 %v1330, %v21
  %v1339 = vadd.f32 %v1331, %v20
  %v1340 = vadd.f32 %v1332, %v21
  %v1341 = vadd.f32 %v1333, %v20
  %v1342 = vadd.f32 %v1334, %v21
  %v1343 = vmul.f32 %v1335, 1.442695
  %v1344 = vpow.pop %v1343
  %v1345 = vmul.f32 %v1336, 1.442695
  %v1346 = vpow.pop %v1345
  %v1347 = vmul.f32 %v1337, 1.442695
  %v1348 = vpow.pop %v1347
  %v1349 = vmul.f32 %v1338, 1.442695
  %v1350 = vpow.pop %v1349
  %v1351 = vmul.f32 %v1339, 1.442695
  %v1352 = vpow.pop %v1351
  %v1353 = vmul.f32 %v1340, 1.442695
  %v1354 = vpow.pop %v1353
  %v1355 = vmul.f32 %v1341, 1.442695
  %v1356 = vpow.pop %v1355
  %v1357 = vmul.f32 %v1342, 1.442695
  %v1358 = vpow.pop %v1357
  %v1359 = vsel %vm352, %v1344, 0.0
  %1360 = vadd.xlane.f32.xlu0 %v1359
  %v1361 = vpop.xlane.xlu0 %1360
  %v1362 = vsel %vm352, %v1346, 0.0
  %1363 = vadd.xlane.f32.xlu0 %v1362
  %v1364 = vpop.xlane.xlu0 %1363
  %v1365 = vsel %vm352, %v1348, 0.0
  %1366 = vadd.xlane.f32.xlu0 %v1365
  %v1367 = vpop.xlane.xlu0 %1366
  %v1368 = vsel %vm352, %v1350, 0.0
  %1369 = vadd.xlane.f32.xlu0 %v1368
  %v1370 = vpop.xlane.xlu0 %1369
  %v1371 = vsel %vm352, %v1352, 0.0
  %1372 = vadd.xlane.f32.xlu0 %v1371
  %v1373 = vpop.xlane.xlu0 %1372
  %v1374 = vsel %vm352, %v1354, 0.0
  %1375 = vadd.xlane.f32.xlu0 %v1374
  %v1376 = vpop.xlane.xlu0 %1375
  %v1377 = vsel %vm352, %v1356, 0.0
  %1378 = vadd.xlane.f32.xlu0 %v1377
  %v1379 = vpop.xlane.xlu0 %1378
  %v1380 = vsel %vm352, %v1358, 0.0
  %1381 = vadd.xlane.f32.xlu0 %v1380
  %v1382 = vpop.xlane.xlu0 %1381
  %v1383 = vrcp.pop %v1361
  %v1384 = vrcp.pop %v1364
  %v1385 = vrcp.pop %v1367
  %v1386 = vrcp.pop %v1370
  %v1387 = vrcp.pop %v1373
  %v1388 = vrcp.pop %v1376
  %v1389 = vrcp.pop %v1379
  %v1390 = vrcp.pop %v1382
  %v1392 = vsel %vm352, %v1344, 0
  %v1395 = vsel %vm352, %v1346, 0
  %1397 = vmatprep.subr.mxu0 0.0
  %1398 = vmatpush1.msra.mxu0 0.0
  %1399 = vmatprep.subr.mxu0 0.0
  %1400 = vmatpush1.msra.mxu0 0.0
  %1401 = vmatprep.subr.mxu0 0.0
  %1402 = vmatpush1.msra.mxu0 0.0
  %1403 = vmatprep.subr.mxu0 0.0
  %1404 = vmatpush1.msra.mxu0 0.0
  %1405 = vmatprep.subr.mxu0 0.0
  %1406 = vmatpush1.msra.mxu0 0.0
  %1407 = vmatprep.subr.mxu0 0.0
  %1408 = vmatpush1.msra.mxu0 0.0
  %1409 = vmatprep.subr.mxu0 0.0
  %1410 = vmatpush1.msra.mxu0 0.0
  %1411 = vmatprep.subr.mxu0 0.0
  %1412 = vmatpush1.msra.mxu0 0.0
  %1413 = vmatprep.subr.mxu0 0.0
  %1414 = vmatpush1.msra.mxu0 0.0
  %1415 = vmatprep.subr.mxu0 0.0
  %1416 = vmatpush1.msra.mxu0 0.0
  %1417 = vmatprep.subr.mxu0 0.0
  %1418 = vmatpush1.msra.mxu0 0.0
  %1419 = vmatprep.subr.mxu0 0.0
  %1420 = vmatpush1.msra.mxu0 0.0
  %1421 = vmatprep.subr.mxu0 0.0
  %1422 = vmatpush1.msra.mxu0 0.0
  %1423 = vmatprep.subr.mxu0 0.0
  %1424 = vmatpush1.msra.mxu0 0.0
  %1425 = vmatprep.subr.mxu0 0.0
  %1426 = vmatpush1.msra.mxu0 %v1132
  %1427 = vmatprep.subr.mxu0 0.0
  %1428 = vmatpush1.msra.mxu0 %v1131
  %1429 = vmatprep.subr.mxu0 0.0
  %1430 = vmatpush2.msra.mxu0 0.0
  %1431 = vmatprep.subr.mxu0 0.0
  %1432 = vmatpush2.msra.mxu0 0.0
  %1433 = vmatprep.subr.mxu0 0.0
  %1434 = vmatpush2.msra.mxu0 0.0
  %1435 = vmatprep.subr.mxu0 0.0
  %1436 = vmatpush2.msra.mxu0 0.0
  %1437 = vmatprep.subr.mxu0 0.0
  %1438 = vmatpush2.msra.mxu0 0.0
  %1439 = vmatprep.subr.mxu0 0.0
  %1440 = vmatpush2.msra.mxu0 0.0
  %1441 = vmatprep.subr.mxu0 0.0
  %1442 = vmatpush2.msra.mxu0 0.0
  %1443 = vmatprep.subr.mxu0 0.0
  %1444 = vmatpush2.msra.mxu0 0.0
  %1445 = vmatprep.subr.mxu0 0.0
  %1446 = vmatpush2.msra.mxu0 0.0
  %1447 = vmatprep.subr.mxu0 0.0
  %1448 = vmatpush2.msra.mxu0 0.0
  %1449 = vmatprep.subr.mxu0 0.0
  %1450 = vmatpush2.msra.mxu0 0.0
  %1451 = vmatprep.subr.mxu0 0.0
  %1452 = vmatpush2.msra.mxu0 0.0
  %1453 = vmatprep.subr.mxu0 0.0
  %1454 = vmatpush2.msra.mxu0 0.0
  %1455 = vmatprep.subr.mxu0 0.0
  %1456 = vmatpush2.msra.mxu0 0.0
  %1457 = vmatprep.subr.mxu0 0.0
  %1458 = vmatpush2.msra.mxu0 0.0
  %1459 = vmatprep.subr.mxu0 0.0
  %1460 = vmatpush2.msra.mxu0 0.0
  %1461 = vmatprep.mubr.f32.mxu0 0.0
  %1462 = vmatmul.mubr.f32.gmra.mxu0 %v1392
  %v1463 = vpop.f32.mrf.mxu0
  %v1464 = vadd.f32 0.0, %v1463
  %v1465 = vpop.f32.mrf.mxu0
  %1466 = vmatprep.mubr.f32.mxu0 0.0
  %1467 = vmatmul.mubr.f32.gmra.mxu0 %v1395
  %v1468 = vpop.f32.mrf.mxu0
  %v1469 = vadd.f32 0.0, %v1468
  %v1470 = vpop.f32.mrf.mxu0
  %1471 = vdwg.mxu0
  %v1472 = vmul.f32 %v1464, %v1383
  %v1473 = vmul.f32 %v1469, %v1384
  %1474 = vrot.lane.b32.xlu0 %v1131, 120
  %v1475 = vpop.permute.xlu0 %1474
  %1476 = vrot.lane.b32.xlu0 %v1132, 120
  %v1477 = vpop.permute.xlu0 %1476
  %v1481 = vsel %vm352, %v1348, 0
  %v1484 = vsel %vm352, %v1350, 0
  %1486 = vmatprep.subr.mxu0 0.0
  %1487 = vmatpush1.msra.mxu0 0.0
  %1488 = vmatprep.subr.mxu0 0.0
  %1489 = vmatpush1.msra.mxu0 0.0
  %1490 = vmatprep.subr.mxu0 0.0
  %1491 = vmatpush1.msra.mxu0 0.0
  %1492 = vmatprep.subr.mxu0 0.0
  %1493 = vmatpush1.msra.mxu0 0.0
  %1494 = vmatprep.subr.mxu0 0.0
  %1495 = vmatpush1.msra.mxu0 0.0
  %1496 = vmatprep.subr.mxu0 0.0
  %1497 = vmatpush1.msra.mxu0 0.0
  %1498 = vmatprep.subr.mxu0 0.0
  %1499 = vmatpush1.msra.mxu0 0.0
  %1500 = vmatprep.subr.mxu0 0.0
  %1501 = vmatpush1.msra.mxu0 0.0
  %1502 = vmatprep.subr.mxu0 0.0
  %1503 = vmatpush1.msra.mxu0 0.0
  %1504 = vmatprep.subr.mxu0 0.0
  %1505 = vmatpush1.msra.mxu0 0.0
  %1506 = vmatprep.subr.mxu0 0.0
  %1507 = vmatpush1.msra.mxu0 0.0
  %1508 = vmatprep.subr.mxu0 0.0
  %1509 = vmatpush1.msra.mxu0 0.0
  %1510 = vmatprep.subr.mxu0 0.0
  %1511 = vmatpush1.msra.mxu0 0.0
  %1512 = vmatprep.subr.mxu0 0.0
  %1513 = vmatpush1.msra.mxu0 0.0
  %1514 = vmatprep.subr.mxu0 0.0
  %1515 = vmatpush1.msra.mxu0 %v1477
  %1516 = vmatprep.subr.mxu0 0.0
  %1517 = vmatpush1.msra.mxu0 %v1475
  %1518 = vmatprep.subr.mxu0 0.0
  %1519 = vmatpush2.msra.mxu0 0.0
  %1520 = vmatprep.subr.mxu0 0.0
  %1521 = vmatpush2.msra.mxu0 0.0
  %1522 = vmatprep.subr.mxu0 0.0
  %1523 = vmatpush2.msra.mxu0 0.0
  %1524 = vmatprep.subr.mxu0 0.0
  %1525 = vmatpush2.msra.mxu0 0.0
  %1526 = vmatprep.subr.mxu0 0.0
  %1527 = vmatpush2.msra.mxu0 0.0
  %1528 = vmatprep.subr.mxu0 0.0
  %1529 = vmatpush2.msra.mxu0 0.0
  %1530 = vmatprep.subr.mxu0 0.0
  %1531 = vmatpush2.msra.mxu0 0.0
  %1532 = vmatprep.subr.mxu0 0.0
  %1533 = vmatpush2.msra.mxu0 0.0
  %1534 = vmatprep.subr.mxu0 0.0
  %1535 = vmatpush2.msra.mxu0 0.0
  %1536 = vmatprep.subr.mxu0 0.0
  %1537 = vmatpush2.msra.mxu0 0.0
  %1538 = vmatprep.subr.mxu0 0.0
  %1539 = vmatpush2.msra.mxu0 0.0
  %1540 = vmatprep.subr.mxu0 0.0
  %1541 = vmatpush2.msra.mxu0 0.0
  %1542 = vmatprep.subr.mxu0 0.0
  %1543 = vmatpush2.msra.mxu0 0.0
  %1544 = vmatprep.subr.mxu0 0.0
  %1545 = vmatpush2.msra.mxu0 0.0
  %1546 = vmatprep.subr.mxu0 0.0
  %1547 = vmatpush2.msra.mxu0 0.0
  %1548 = vmatprep.subr.mxu0 0.0
  %1549 = vmatpush2.msra.mxu0 0.0
  %1550 = vmatprep.mubr.f32.mxu0 0.0
  %1551 = vmatmul.mubr.f32.gmra.mxu0 %v1481
  %v1552 = vpop.f32.mrf.mxu0
  %v1553 = vadd.f32 0.0, %v1552
  %v1554 = vpop.f32.mrf.mxu0
  %1555 = vmatprep.mubr.f32.mxu0 0.0
  %1556 = vmatmul.mubr.f32.gmra.mxu0 %v1484
  %v1557 = vpop.f32.mrf.mxu0
  %v1558 = vadd.f32 0.0, %v1557
  %v1559 = vpop.f32.mrf.mxu0
  %1560 = vdwg.mxu0
  %v1561 = vmul.f32 %v1553, %v1385
  %v1562 = vmul.f32 %v1558, %v1386
  %v1564 = vsel %vm44, %v1561, 0
  %v1567 = vsel %vm44, %v1562, 0
  %1569 = vmatprep.subr.mxu0 0.0
  %1570 = vmatpush1.msra.mxu0 0.0
  %1571 = vmatprep.subr.mxu0 0.0
  %1572 = vmatpush1.msra.mxu0 0.0
  %1573 = vmatprep.subr.mxu0 0.0
  %1574 = vmatpush1.msra.mxu0 0.0
  %1575 = vmatprep.subr.mxu0 0.0
  %1576 = vmatpush1.msra.mxu0 0.0
  %1577 = vmatprep.subr.mxu0 0.0
  %1578 = vmatpush1.msra.mxu0 0.0
  %1579 = vmatprep.subr.mxu0 0.0
  %1580 = vmatpush1.msra.mxu0 0.0
  %1581 = vmatprep.subr.mxu0 0.0
  %1582 = vmatpush1.msra.mxu0 0.0
  %1583 = vmatprep.subr.mxu0 0.0
  %1584 = vmatpush1.msra.mxu0 0.0
  %1585 = vmatprep.subr.mxu0 0.0
  %1586 = vmatpush1.msra.mxu0 0.0
  %1587 = vmatprep.subr.mxu0 0.0
  %1588 = vmatpush1.msra.mxu0 0.0
  %1589 = vmatprep.subr.mxu0 0.0
  %1590 = vmatpush1.msra.mxu0 0.0
  %1591 = vmatprep.subr.mxu0 0.0
  %1592 = vmatpush1.msra.mxu0 0.0
  %1593 = vmatprep.subr.mxu0 0.0
  %1594 = vmatpush1.msra.mxu0 0.0
  %1595 = vmatprep.subr.mxu0 0.0
  %1596 = vmatpush1.msra.mxu0 0.0
  %1597 = vmatprep.subr.mxu0 0.0
  %1598 = vmatpush1.msra.mxu0 0.0
  %1599 = vmatprep.subr.mxu0 0.0
  %1600 = vmatpush1.msra.mxu0 %v36
  %1601 = vmatprep.subr.mxu0 0.0
  %1602 = vmatpush2.msra.mxu0 0.0
  %1603 = vmatprep.subr.mxu0 0.0
  %1604 = vmatpush2.msra.mxu0 0.0
  %1605 = vmatprep.subr.mxu0 0.0
  %1606 = vmatpush2.msra.mxu0 0.0
  %1607 = vmatprep.subr.mxu0 0.0
  %1608 = vmatpush2.msra.mxu0 0.0
  %1609 = vmatprep.subr.mxu0 0.0
  %1610 = vmatpush2.msra.mxu0 0.0
  %1611 = vmatprep.subr.mxu0 0.0
  %1612 = vmatpush2.msra.mxu0 0.0
  %1613 = vmatprep.subr.mxu0 0.0
  %1614 = vmatpush2.msra.mxu0 0.0
  %1615 = vmatprep.subr.mxu0 0.0
  %1616 = vmatpush2.msra.mxu0 0.0
  %1617 = vmatprep.subr.mxu0 0.0
  %1618 = vmatpush2.msra.mxu0 0.0
  %1619 = vmatprep.subr.mxu0 0.0
  %1620 = vmatpush2.msra.mxu0 0.0
  %1621 = vmatprep.subr.mxu0 0.0
  %1622 = vmatpush2.msra.mxu0 0.0
  %1623 = vmatprep.subr.mxu0 0.0
  %1624 = vmatpush2.msra.mxu0 0.0
  %1625 = vmatprep.subr.mxu0 0.0
  %1626 = vmatpush2.msra.mxu0 0.0
  %1627 = vmatprep.subr.mxu0 0.0
  %1628 = vmatpush2.msra.mxu0 0.0
  %1629 = vmatprep.subr.mxu0 0.0
  %1630 = vmatpush2.msra.mxu0 0.0
  %1631 = vmatprep.subr.mxu0 0.0
  %1632 = vmatpush2.msra.mxu0 0.0
  %1633 = vmatprep.mubr.f32.mxu0 0.0
  %1634 = vmatmul.mubr.f32.gmra.mxu0 %v1564
  %v1635 = vpop.f32.mrf.mxu0
  %v1636 = vadd.f32 0.0, %v1635
  %v1637 = vpop.f32.mrf.mxu0
  %1638 = vmatprep.mubr.f32.mxu0 0.0
  %1639 = vmatmul.mubr.f32.gmra.mxu0 %v1567
  %v1640 = vpop.f32.mrf.mxu0
  %v1641 = vadd.f32 0.0, %v1640
  %v1642 = vpop.f32.mrf.mxu0
  %1643 = vdwg.mxu0
  %v1645 = vsel %vm44, %v1472, 0
  %v1648 = vsel %vm44, %v1473, 0
  %1650 = vmatprep.subr.mxu0 0.0
  %1651 = vmatpush1.msra.mxu0 0.0
  %1652 = vmatprep.subr.mxu0 0.0
  %1653 = vmatpush1.msra.mxu0 0.0
  %1654 = vmatprep.subr.mxu0 0.0
  %1655 = vmatpush1.msra.mxu0 0.0
  %1656 = vmatprep.subr.mxu0 0.0
  %1657 = vmatpush1.msra.mxu0 0.0
  %1658 = vmatprep.subr.mxu0 0.0
  %1659 = vmatpush1.msra.mxu0 0.0
  %1660 = vmatprep.subr.mxu0 0.0
  %1661 = vmatpush1.msra.mxu0 0.0
  %1662 = vmatprep.subr.mxu0 0.0
  %1663 = vmatpush1.msra.mxu0 0.0
  %1664 = vmatprep.subr.mxu0 0.0
  %1665 = vmatpush1.msra.mxu0 0.0
  %1666 = vmatprep.subr.mxu0 0.0
  %1667 = vmatpush1.msra.mxu0 0.0
  %1668 = vmatprep.subr.mxu0 0.0
  %1669 = vmatpush1.msra.mxu0 0.0
  %1670 = vmatprep.subr.mxu0 0.0
  %1671 = vmatpush1.msra.mxu0 0.0
  %1672 = vmatprep.subr.mxu0 0.0
  %1673 = vmatpush1.msra.mxu0 0.0
  %1674 = vmatprep.subr.mxu0 0.0
  %1675 = vmatpush1.msra.mxu0 0.0
  %1676 = vmatprep.subr.mxu0 0.0
  %1677 = vmatpush1.msra.mxu0 0.0
  %1678 = vmatprep.subr.mxu0 0.0
  %1679 = vmatpush1.msra.mxu0 0.0
  %1680 = vmatprep.subr.mxu0 0.0
  %1681 = vmatpush1.msra.mxu0 %v35
  %1682 = vmatprep.subr.mxu0 0.0
  %1683 = vmatpush2.msra.mxu0 0.0
  %1684 = vmatprep.subr.mxu0 0.0
  %1685 = vmatpush2.msra.mxu0 0.0
  %1686 = vmatprep.subr.mxu0 0.0
  %1687 = vmatpush2.msra.mxu0 0.0
  %1688 = vmatprep.subr.mxu0 0.0
  %1689 = vmatpush2.msra.mxu0 0.0
  %1690 = vmatprep.subr.mxu0 0.0
  %1691 = vmatpush2.msra.mxu0 0.0
  %1692 = vmatprep.subr.mxu0 0.0
  %1693 = vmatpush2.msra.mxu0 0.0
  %1694 = vmatprep.subr.mxu0 0.0
  %1695 = vmatpush2.msra.mxu0 0.0
  %1696 = vmatprep.subr.mxu0 0.0
  %1697 = vmatpush2.msra.mxu0 0.0
  %1698 = vmatprep.subr.mxu0 0.0
  %1699 = vmatpush2.msra.mxu0 0.0
  %1700 = vmatprep.subr.mxu0 0.0
  %1701 = vmatpush2.msra.mxu0 0.0
  %1702 = vmatprep.subr.mxu0 0.0
  %1703 = vmatpush2.msra.mxu0 0.0
  %1704 = vmatprep.subr.mxu0 0.0
  %1705 = vmatpush2.msra.mxu0 0.0
  %1706 = vmatprep.subr.mxu0 0.0
  %1707 = vmatpush2.msra.mxu0 0.0
  %1708 = vmatprep.subr.mxu0 0.0
  %1709 = vmatpush2.msra.mxu0 0.0
  %1710 = vmatprep.subr.mxu0 0.0
  %1711 = vmatpush2.msra.mxu0 0.0
  %1712 = vmatprep.subr.mxu0 0.0
  %1713 = vmatpush2.msra.mxu0 0.0
  %1714 = vmatprep.mubr.f32.mxu0 0.0
  %1715 = vmatmul.mubr.f32.gmra.mxu0 %v1645
  %v1716 = vpop.f32.mrf.mxu0
  %v1717 = vadd.f32 %v1636, %v1716
  %v1718 = vpop.f32.mrf.mxu0
  %1719 = vmatprep.mubr.f32.mxu0 0.0
  %1720 = vmatmul.mubr.f32.gmra.mxu0 %v1648
  %v1721 = vpop.f32.mrf.mxu0
  %v1722 = vadd.f32 %v1641, %v1721
  %v1723 = vpop.f32.mrf.mxu0
  %1724 = vdwg.mxu0
  %1725 = vrot.lane.b32.xlu0 %v1131, 112
  %v1726 = vpop.permute.xlu0 %1725
  %1727 = vrot.lane.b32.xlu0 %v1132, 112
  %v1728 = vpop.permute.xlu0 %1727
  %v1732 = vsel %vm352, %v1352, 0
  %v1735 = vsel %vm352, %v1354, 0
  %1737 = vmatprep.subr.mxu0 0.0
  %1738 = vmatpush1.msra.mxu0 0.0
  %1739 = vmatprep.subr.mxu0 0.0
  %1740 = vmatpush1.msra.mxu0 0.0
  %1741 = vmatprep.subr.mxu0 0.0
  %1742 = vmatpush1.msra.mxu0 0.0
  %1743 = vmatprep.subr.mxu0 0.0
  %1744 = vmatpush1.msra.mxu0 0.0
  %1745 = vmatprep.subr.mxu0 0.0
  %1746 = vmatpush1.msra.mxu0 0.0
  %1747 = vmatprep.subr.mxu0 0.0
  %1748 = vmatpush1.msra.mxu0 0.0
  %1749 = vmatprep.subr.mxu0 0.0
  %1750 = vmatpush1.msra.mxu0 0.0
  %1751 = vmatprep.subr.mxu0 0.0
  %1752 = vmatpush1.msra.mxu0 0.0
  %1753 = vmatprep.subr.mxu0 0.0
  %1754 = vmatpush1.msra.mxu0 0.0
  %1755 = vmatprep.subr.mxu0 0.0
  %1756 = vmatpush1.msra.mxu0 0.0
  %1757 = vmatprep.subr.mxu0 0.0
  %1758 = vmatpush1.msra.mxu0 0.0
  %1759 = vmatprep.subr.mxu0 0.0
  %1760 = vmatpush1.msra.mxu0 0.0
  %1761 = vmatprep.subr.mxu0 0.0
  %1762 = vmatpush1.msra.mxu0 0.0
  %1763 = vmatprep.subr.mxu0 0.0
  %1764 = vmatpush1.msra.mxu0 0.0
  %1765 = vmatprep.subr.mxu0 0.0
  %1766 = vmatpush1.msra.mxu0 %v1728
  %1767 = vmatprep.subr.mxu0 0.0
  %1768 = vmatpush1.msra.mxu0 %v1726
  %1769 = vmatprep.subr.mxu0 0.0
  %1770 = vmatpush2.msra.mxu0 0.0
  %1771 = vmatprep.subr.mxu0 0.0
  %1772 = vmatpush2.msra.mxu0 0.0
  %1773 = vmatprep.subr.mxu0 0.0
  %1774 = vmatpush2.msra.mxu0 0.0
  %1775 = vmatprep.subr.mxu0 0.0
  %1776 = vmatpush2.msra.mxu0 0.0
  %1777 = vmatprep.subr.mxu0 0.0
  %1778 = vmatpush2.msra.mxu0 0.0
  %1779 = vmatprep.subr.mxu0 0.0
  %1780 = vmatpush2.msra.mxu0 0.0
  %1781 = vmatprep.subr.mxu0 0.0
  %1782 = vmatpush2.msra.mxu0 0.0
  %1783 = vmatprep.subr.mxu0 0.0
  %1784 = vmatpush2.msra.mxu0 0.0
  %1785 = vmatprep.subr.mxu0 0.0
  %1786 = vmatpush2.msra.mxu0 0.0
  %1787 = vmatprep.subr.mxu0 0.0
  %1788 = vmatpush2.msra.mxu0 0.0
  %1789 = vmatprep.subr.mxu0 0.0
  %1790 = vmatpush2.msra.mxu0 0.0
  %1791 = vmatprep.subr.mxu0 0.0
  %1792 = vmatpush2.msra.mxu0 0.0
  %1793 = vmatprep.subr.mxu0 0.0
  %1794 = vmatpush2.msra.mxu0 0.0
  %1795 = vmatprep.subr.mxu0 0.0
  %1796 = vmatpush2.msra.mxu0 0.0
  %1797 = vmatprep.subr.mxu0 0.0
  %1798 = vmatpush2.msra.mxu0 0.0
  %1799 = vmatprep.subr.mxu0 0.0
  %1800 = vmatpush2.msra.mxu0 0.0
  %1801 = vmatprep.mubr.f32.mxu0 0.0
  %1802 = vmatmul.mubr.f32.gmra.mxu0 %v1732
  %v1803 = vpop.f32.mrf.mxu0
  %v1804 = vadd.f32 0.0, %v1803
  %v1805 = vpop.f32.mrf.mxu0
  %1806 = vmatprep.mubr.f32.mxu0 0.0
  %1807 = vmatmul.mubr.f32.gmra.mxu0 %v1735
  %v1808 = vpop.f32.mrf.mxu0
  %v1809 = vadd.f32 0.0, %v1808
  %v1810 = vpop.f32.mrf.mxu0
  %1811 = vdwg.mxu0
  %v1812 = vmul.f32 %v1804, %v1387
  %v1813 = vmul.f32 %v1809, %v1388
  %v1815 = vsel %vm44, %v1812, 0
  %v1818 = vsel %vm44, %v1813, 0
  %1820 = vmatprep.subr.mxu0 0.0
  %1821 = vmatpush1.msra.mxu0 0.0
  %1822 = vmatprep.subr.mxu0 0.0
  %1823 = vmatpush1.msra.mxu0 0.0
  %1824 = vmatprep.subr.mxu0 0.0
  %1825 = vmatpush1.msra.mxu0 0.0
  %1826 = vmatprep.subr.mxu0 0.0
  %1827 = vmatpush1.msra.mxu0 0.0
  %1828 = vmatprep.subr.mxu0 0.0
  %1829 = vmatpush1.msra.mxu0 0.0
  %1830 = vmatprep.subr.mxu0 0.0
  %1831 = vmatpush1.msra.mxu0 0.0
  %1832 = vmatprep.subr.mxu0 0.0
  %1833 = vmatpush1.msra.mxu0 0.0
  %1834 = vmatprep.subr.mxu0 0.0
  %1835 = vmatpush1.msra.mxu0 0.0
  %1836 = vmatprep.subr.mxu0 0.0
  %1837 = vmatpush1.msra.mxu0 0.0
  %1838 = vmatprep.subr.mxu0 0.0
  %1839 = vmatpush1.msra.mxu0 0.0
  %1840 = vmatprep.subr.mxu0 0.0
  %1841 = vmatpush1.msra.mxu0 0.0
  %1842 = vmatprep.subr.mxu0 0.0
  %1843 = vmatpush1.msra.mxu0 0.0
  %1844 = vmatprep.subr.mxu0 0.0
  %1845 = vmatpush1.msra.mxu0 0.0
  %1846 = vmatprep.subr.mxu0 0.0
  %1847 = vmatpush1.msra.mxu0 0.0
  %1848 = vmatprep.subr.mxu0 0.0
  %1849 = vmatpush1.msra.mxu0 0.0
  %1850 = vmatprep.subr.mxu0 0.0
  %1851 = vmatpush1.msra.mxu0 %v37
  %1852 = vmatprep.subr.mxu0 0.0
  %1853 = vmatpush2.msra.mxu0 0.0
  %1854 = vmatprep.subr.mxu0 0.0
  %1855 = vmatpush2.msra.mxu0 0.0
  %1856 = vmatprep.subr.mxu0 0.0
  %1857 = vmatpush2.msra.mxu0 0.0
  %1858 = vmatprep.subr.mxu0 0.0
  %1859 = vmatpush2.msra.mxu0 0.0
  %1860 = vmatprep.subr.mxu0 0.0
  %1861 = vmatpush2.msra.mxu0 0.0
  %1862 = vmatprep.subr.mxu0 0.0
  %1863 = vmatpush2.msra.mxu0 0.0
  %1864 = vmatprep.subr.mxu0 0.0
  %1865 = vmatpush2.msra.mxu0 0.0
  %1866 = vmatprep.subr.mxu0 0.0
  %1867 = vmatpush2.msra.mxu0 0.0
  %1868 = vmatprep.subr.mxu0 0.0
  %1869 = vmatpush2.msra.mxu0 0.0
  %1870 = vmatprep.subr.mxu0 0.0
  %1871 = vmatpush2.msra.mxu0 0.0
  %1872 = vmatprep.subr.mxu0 0.0
  %1873 = vmatpush2.msra.mxu0 0.0
  %1874 = vmatprep.subr.mxu0 0.0
  %1875 = vmatpush2.msra.mxu0 0.0
  %1876 = vmatprep.subr.mxu0 0.0
  %1877 = vmatpush2.msra.mxu0 0.0
  %1878 = vmatprep.subr.mxu0 0.0
  %1879 = vmatpush2.msra.mxu0 0.0
  %1880 = vmatprep.subr.mxu0 0.0
  %1881 = vmatpush2.msra.mxu0 0.0
  %1882 = vmatprep.subr.mxu0 0.0
  %1883 = vmatpush2.msra.mxu0 0.0
  %1884 = vmatprep.mubr.f32.mxu0 0.0
  %1885 = vmatmul.mubr.f32.gmra.mxu0 %v1815
  %v1886 = vpop.f32.mrf.mxu0
  %v1887 = vadd.f32 0.0, %v1886
  %v1888 = vpop.f32.mrf.mxu0
  %1889 = vmatprep.mubr.f32.mxu0 0.0
  %1890 = vmatmul.mubr.f32.gmra.mxu0 %v1818
  %v1891 = vpop.f32.mrf.mxu0
  %v1892 = vadd.f32 0.0, %v1891
  %v1893 = vpop.f32.mrf.mxu0
  %1894 = vdwg.mxu0
  %v1895 = vadd.f32 %v1717, %v1887
  %v1896 = vadd.f32 %v1722, %v1892
  %1897 = vrot.lane.b32.xlu0 %v1131, 104
  %v1898 = vpop.permute.xlu0 %1897
  %1899 = vrot.lane.b32.xlu0 %v1132, 104
  %v1900 = vpop.permute.xlu0 %1899
  %v1904 = vsel %vm352, %v1356, 0
  %v1907 = vsel %vm352, %v1358, 0
  %1909 = vmatprep.subr.mxu0 0.0
  %1910 = vmatpush1.msra.mxu0 0.0
  %1911 = vmatprep.subr.mxu0 0.0
  %1912 = vmatpush1.msra.mxu0 0.0
  %1913 = vmatprep.subr.mxu0 0.0
  %1914 = vmatpush1.msra.mxu0 0.0
  %1915 = vmatprep.subr.mxu0 0.0
  %1916 = vmatpush1.msra.mxu0 0.0
  %1917 = vmatprep.subr.mxu0 0.0
  %1918 = vmatpush1.msra.mxu0 0.0
  %1919 = vmatprep.subr.mxu0 0.0
  %1920 = vmatpush1.msra.mxu0 0.0
  %1921 = vmatprep.subr.mxu0 0.0
  %1922 = vmatpush1.msra.mxu0 0.0
  %1923 = vmatprep.subr.mxu0 0.0
  %1924 = vmatpush1.msra.mxu0 0.0
  %1925 = vmatprep.subr.mxu0 0.0
  %1926 = vmatpush1.msra.mxu0 0.0
  %1927 = vmatprep.subr.mxu0 0.0
  %1928 = vmatpush1.msra.mxu0 0.0
  %1929 = vmatprep.subr.mxu0 0.0
  %1930 = vmatpush1.msra.mxu0 0.0
  %1931 = vmatprep.subr.mxu0 0.0
  %1932 = vmatpush1.msra.mxu0 0.0
  %1933 = vmatprep.subr.mxu0 0.0
  %1934 = vmatpush1.msra.mxu0 0.0
  %1935 = vmatprep.subr.mxu0 0.0
  %1936 = vmatpush1.msra.mxu0 0.0
  %1937 = vmatprep.subr.mxu0 0.0
  %1938 = vmatpush1.msra.mxu0 %v1900
  %1939 = vmatprep.subr.mxu0 0.0
  %1940 = vmatpush1.msra.mxu0 %v1898
  %1941 = vmatprep.subr.mxu0 0.0
  %1942 = vmatpush2.msra.mxu0 0.0
  %1943 = vmatprep.subr.mxu0 0.0
  %1944 = vmatpush2.msra.mxu0 0.0
  %1945 = vmatprep.subr.mxu0 0.0
  %1946 = vmatpush2.msra.mxu0 0.0
  %1947 = vmatprep.subr.mxu0 0.0
  %1948 = vmatpush2.msra.mxu0 0.0
  %1949 = vmatprep.subr.mxu0 0.0
  %1950 = vmatpush2.msra.mxu0 0.0
  %1951 = vmatprep.subr.mxu0 0.0
  %1952 = vmatpush2.msra.mxu0 0.0
  %1953 = vmatprep.subr.mxu0 0.0
  %1954 = vmatpush2.msra.mxu0 0.0
  %1955 = vmatprep.subr.mxu0 0.0
  %1956 = vmatpush2.msra.mxu0 0.0
  %1957 = vmatprep.subr.mxu0 0.0
  %1958 = vmatpush2.msra.mxu0 0.0
  %1959 = vmatprep.subr.mxu0 0.0
  %1960 = vmatpush2.msra.mxu0 0.0
  %1961 = vmatprep.subr.mxu0 0.0
  %1962 = vmatpush2.msra.mxu0 0.0
  %1963 = vmatprep.subr.mxu0 0.0
  %1964 = vmatpush2.msra.mxu0 0.0
  %1965 = vmatprep.subr.mxu0 0.0
  %1966 = vmatpush2.msra.mxu0 0.0
  %1967 = vmatprep.subr.mxu0 0.0
  %1968 = vmatpush2.msra.mxu0 0.0
  %1969 = vmatprep.subr.mxu0 0.0
  %1970 = vmatpush2.msra.mxu0 0.0
  %1971 = vmatprep.subr.mxu0 0.0
  %1972 = vmatpush2.msra.mxu0 0.0
  %1973 = vmatprep.mubr.f32.mxu0 0.0
  %1974 = vmatmul.mubr.f32.gmra.mxu0 %v1904
  %v1975 = vpop.f32.mrf.mxu0
  %v1976 = vadd.f32 0.0, %v1975
  %v1977 = vpop.f32.mrf.mxu0
  %1978 = vmatprep.mubr.f32.mxu0 0.0
  %1979 = vmatmul.mubr.f32.gmra.mxu0 %v1907
  %v1980 = vpop.f32.mrf.mxu0
  %v1981 = vadd.f32 0.0, %v1980
  %v1982 = vpop.f32.mrf.mxu0
  %1983 = vdwg.mxu0
  %v1984 = vmul.f32 %v1976, %v1389
  %v1985 = vmul.f32 %v1981, %v1390
  %v1987 = vsel %vm44, %v1984, 0
  %v1990 = vsel %vm44, %v1985, 0
  %1992 = vmatprep.subr.mxu0 0.0
  %1993 = vmatpush1.msra.mxu0 0.0
  %1994 = vmatprep.subr.mxu0 0.0
  %1995 = vmatpush1.msra.mxu0 0.0
  %1996 = vmatprep.subr.mxu0 0.0
  %1997 = vmatpush1.msra.mxu0 0.0
  %1998 = vmatprep.subr.mxu0 0.0
  %1999 = vmatpush1.msra.mxu0 0.0
  %2000 = vmatprep.subr.mxu0 0.0
  %2001 = vmatpush1.msra.mxu0 0.0
  %2002 = vmatprep.subr.mxu0 0.0
  %2003 = vmatpush1.msra.mxu0 0.0
  %2004 = vmatprep.subr.mxu0 0.0
  %2005 = vmatpush1.msra.mxu0 0.0
  %2006 = vmatprep.subr.mxu0 0.0
  %2007 = vmatpush1.msra.mxu0 0.0
  %2008 = vmatprep.subr.mxu0 0.0
  %2009 = vmatpush1.msra.mxu0 0.0
  %2010 = vmatprep.subr.mxu0 0.0
  %2011 = vmatpush1.msra.mxu0 0.0
  %2012 = vmatprep.subr.mxu0 0.0
  %2013 = vmatpush1.msra.mxu0 0.0
  %2014 = vmatprep.subr.mxu0 0.0
  %2015 = vmatpush1.msra.mxu0 0.0
  %2016 = vmatprep.subr.mxu0 0.0
  %2017 = vmatpush1.msra.mxu0 0.0
  %2018 = vmatprep.subr.mxu0 0.0
  %2019 = vmatpush1.msra.mxu0 0.0
  %2020 = vmatprep.subr.mxu0 0.0
  %2021 = vmatpush1.msra.mxu0 0.0
  %2022 = vmatprep.subr.mxu0 0.0
  %2023 = vmatpush1.msra.mxu0 %v38
  %2024 = vmatprep.subr.mxu0 0.0
  %2025 = vmatpush2.msra.mxu0 0.0
  %2026 = vmatprep.subr.mxu0 0.0
  %2027 = vmatpush2.msra.mxu0 0.0
  %2028 = vmatprep.subr.mxu0 0.0
  %2029 = vmatpush2.msra.mxu0 0.0
  %2030 = vmatprep.subr.mxu0 0.0
  %2031 = vmatpush2.msra.mxu0 0.0
  %2032 = vmatprep.subr.mxu0 0.0
  %2033 = vmatpush2.msra.mxu0 0.0
  %2034 = vmatprep.subr.mxu0 0.0
  %2035 = vmatpush2.msra.mxu0 0.0
  %2036 = vmatprep.subr.mxu0 0.0
  %2037 = vmatpush2.msra.mxu0 0.0
  %2038 = vmatprep.subr.mxu0 0.0
  %2039 = vmatpush2.msra.mxu0 0.0
  %2040 = vmatprep.subr.mxu0 0.0
  %2041 = vmatpush2.msra.mxu0 0.0
  %2042 = vmatprep.subr.mxu0 0.0
  %2043 = vmatpush2.msra.mxu0 0.0
  %2044 = vmatprep.subr.mxu0 0.0
  %2045 = vmatpush2.msra.mxu0 0.0
  %2046 = vmatprep.subr.mxu0 0.0
  %2047 = vmatpush2.msra.mxu0 0.0
  %2048 = vmatprep.subr.mxu0 0.0
  %2049 = vmatpush2.msra.mxu0 0.0
  %2050 = vmatprep.subr.mxu0 0.0
  %2051 = vmatpush2.msra.mxu0 0.0
  %2052 = vmatprep.subr.mxu0 0.0
  %2053 = vmatpush2.msra.mxu0 0.0
  %2054 = vmatprep.subr.mxu0 0.0
  %2055 = vmatpush2.msra.mxu0 0.0
  %2056 = vmatprep.mubr.f32.mxu0 0.0
  %2057 = vmatmul.mubr.f32.gmra.mxu0 %v1987
  %v2058 = vpop.f32.mrf.mxu0
  %v2059 = vadd.f32 0.0, %v2058
  %v2060 = vpop.f32.mrf.mxu0
  %2061 = vmatprep.mubr.f32.mxu0 0.0
  %2062 = vmatmul.mubr.f32.gmra.mxu0 %v1990
  %v2063 = vpop.f32.mrf.mxu0
  %v2064 = vadd.f32 0.0, %v2063
  %v2065 = vpop.f32.mrf.mxu0
  %2066 = vdwg.mxu0
  %v2067 = vadd.f32 %v1895, %v2059
  %v2068 = vadd.f32 %v1896, %v2064
  %v2069 = vlaneseq
  %v2070 = vshrl.u32 %v2069, 7
  %v2071 = vsub.s32 0, %v2070
  %v2072 = vrot.slane %v39, %v2071
  %v2073 = vadd.f32 %v2067, %v2072
  %v2074 = vadd.f32 %v2068, %v2072
  %2075 = vst.msk [vmem:[%s3] sm:$0xff] %vm44, %v2073
  %2076 = vst.msk [vmem:[%s3 + $0x8] sm:$0xff] %vm44, %v2074
  // Predicated region
  $region14: #{tpu_custom_call.1} parent=0 // pred_check
    _
  $region15: #{tpu_custom_call.1} parent=0 // pred_check_branch
    %2078 = sbr.rel (0) target = $region17
  $region16: #{tpu_custom_call.1} parent=0 // pred_region
    _
  $region17: #{tpu_custom_call.1} parent=0 // pred_fallthru
    _
  // Predicated region
  $region18: #{tpu_custom_call.1} parent=0 // pred_check
    _
  $region19: #{tpu_custom_call.1} parent=0 // pred_check_branch
    %2080 = sbr.rel (0) target = $region21
  $region20: #{tpu_custom_call.1} parent=0 // pred_region
    _
  $region21: #{tpu_custom_call.1} parent=0 // pred_fallthru
    _

</llo_original>
